<compile_context>
chip_gen: v5e
topology: v5e:2x2
jax: 0.10.0
libtpu: 0.0.40
codegen_flags: <defaults>
</compile_context>

<pallas_src>
import functools

import jax
import jax.numpy as jnp
from jax.experimental import pallas as pl
from jax.experimental.pallas import tpu as pltpu

VMEM_LIMIT = 32 * 1024 * 1024  # safe on v5e/v6e/v7x; well above our ~8 MiB use


# ----------------------------------------------------------------------------
# Tiling helpers
# ----------------------------------------------------------------------------
def _pick_tile(dim, target, align):
    """Largest tile <= target that divides `dim` and is a multiple of `align`.

    Falls back to the full dim (always a legal block) if no aligned divisor
    exists, so boundary blocks / partial tiles never occur.
    """
    if dim <= target:
        return dim
    for t in range(target, align - 1, -1):
        if dim % t == 0 and t % align == 0:
            return t
    return dim


# ----------------------------------------------------------------------------
# Tiled linear: y = act(x @ w + b) [+ residual], K-accumulated in f32 VMEM
# ----------------------------------------------------------------------------
def _tiled_linear_kernel(act, has_res, x_ref, w_ref, b_ref, *refs):
    if has_res:
        res_ref, o_ref, acc_ref = refs
    else:
        res_ref = None
        o_ref, acc_ref = refs

    kk = pl.program_id(2)

    @pl.when(kk == 0)
    def _():
        acc_ref[...] = jnp.zeros_like(acc_ref)

    acc_ref[...] += jnp.dot(
        x_ref[...].astype(jnp.bfloat16),
        w_ref[...].astype(jnp.bfloat16),
        preferred_element_type=jnp.float32,
    )

    @pl.when(kk == pl.num_programs(2) - 1)
    def _():
        y = acc_ref[...] + b_ref[...].astype(jnp.float32)
        if act == "gelu":
            # TODO(synk): PyTorch nn.GELU defaults to exact erf; tanh-approx is
            # used here (EUP-friendly, ~1e-3 max delta).
            y = jax.nn.gelu(y, approximate=True)
        elif act == "tanh":
            y = jnp.tanh(y)
        if res_ref is not None:
            y = y + res_ref[...].astype(jnp.float32)
        o_ref[...] = y.astype(o_ref.dtype)


def pallas_linear(x, w, b, act=None, residual=None, out_dtype=None,
                  tm=512, tn=512, tk=512):
    M, K = x.shape
    N = w.shape[1]
    out_dtype = out_dtype or x.dtype
    tm = _pick_tile(M, tm, 8)
    tn = _pick_tile(N, tn, 128)
    tk = _pick_tile(K, tk, 128)
    gm, gn, gk = M // tm, N // tn, K // tk

    in_specs = [
        pl.BlockSpec((tm, tk), lambda i, j, k: (i, k)),
        pl.BlockSpec((tk, tn), lambda i, j, k: (k, j)),
        pl.BlockSpec((1, tn), lambda i, j, k: (0, j)),
    ]
    inputs = [x, w, b.reshape(1, N)]
    io_aliases = {}
    if residual is not None:
        in_specs.append(pl.BlockSpec((tm, tn), lambda i, j, k: (i, j)))
        inputs.append(residual)
        io_aliases = {3: 0}  # accumulate residual in place (same HBM buffer)

    res_bytes = residual.size * residual.dtype.itemsize if residual is not None else 0
    cost = pl.CostEstimate(
        flops=2 * M * N * K,
        transcendentals=(M * N if act is not None else 0),
        bytes_accessed=int(x.size * x.dtype.itemsize * gn          # x re-read per N-tile
                           + w.size * w.dtype.itemsize * gm        # w re-read per M-tile
                           + N * 4 * gm
                           + res_bytes
                           + M * N * jnp.dtype(out_dtype).itemsize),
    )
    return pl.pallas_call(
        functools.partial(_tiled_linear_kernel, act, residual is not None),
        grid=(gm, gn, gk),
        in_specs=in_specs,
        out_specs=pl.BlockSpec((tm, tn), lambda i, j, k: (i, j)),
        out_shape=jax.ShapeDtypeStruct((M, N), out_dtype),
        scratch_shapes=[pltpu.VMEM((tm, tn), jnp.float32)],
        compiler_params=pltpu.CompilerParams(
            dimension_semantics=("parallel", "parallel", "arbitrary"),
            vmem_limit_bytes=VMEM_LIMIT),
        input_output_aliases=io_aliases,
        cost_estimate=cost,
    )(*inputs)


# ----------------------------------------------------------------------------
# Fused LayerNorm + linear: y = act(LN(x) @ w + b)
# The LN'd (and bf16-cast) activations are computed once per row tile (j == 0)
# into a VMEM scratch and reused for every N-tile.
# ----------------------------------------------------------------------------
def _ln_linear_kernel(act, eps, x_ref, g_ref, bln_ref, w_ref, b_ref,
                      o_ref, xn_ref):
    @pl.when(pl.program_id(1) == 0)
    def _():
        xv = x_ref[...].astype(jnp.float32)
        mu = jnp.mean(xv, axis=-1, keepdims=True)
        var = jnp.mean(jnp.square(xv - mu), axis=-1, keepdims=True)
        xn = (xv - mu) * jax.lax.rsqrt(var + eps)
        xn = xn * g_ref[...].astype(jnp.float32) + bln_ref[...].astype(jnp.float32)
        xn_ref[...] = xn.astype(xn_ref.dtype)   # cast to bf16 once per i

    y = jnp.dot(xn_ref[...], w_ref[...].astype(jnp.bfloat16),
                preferred_element_type=jnp.float32)
    y = y + b_ref[...].astype(jnp.float32)
    if act == "gelu":
        y = jax.nn.gelu(y, approximate=True)
    elif act == "tanh":
        y = jnp.tanh(y)
    o_ref[...] = y.astype(o_ref.dtype)


def pallas_ln_linear(x, gamma, beta, w, b, act=None, out_dtype=None,
                     eps=1e-6, tm=512, tn=512):
    M, K = x.shape
    N = w.shape[1]
    out_dtype = out_dtype or x.dtype
    tm = _pick_tile(M, tm, 8)
    tn = _pick_tile(N, tn, 128)
    gm, gn = M // tm, N // tn

    cost = pl.CostEstimate(
        flops=2 * M * N * K + 10 * M * K,
        transcendentals=M + (M * N if act is not None else 0),
        bytes_accessed=int(x.size * x.dtype.itemsize             # x fetched once per i
                           + w.size * w.dtype.itemsize * gm      # w re-read per M-tile
                           + M * N * jnp.dtype(out_dtype).itemsize),
    )
    return pl.pallas_call(
        functools.partial(_ln_linear_kernel, act, eps),
        grid=(gm, gn),
        in_specs=[
            pl.BlockSpec((tm, K), lambda i, j: (i, 0)),
            pl.BlockSpec((1, K), lambda i, j: (0, 0)),
            pl.BlockSpec((1, K), lambda i, j: (0, 0)),
            pl.BlockSpec((K, tn), lambda i, j: (0, j)),
            pl.BlockSpec((1, tn), lambda i, j: (0, j)),
        ],
        out_specs=pl.BlockSpec((tm, tn), lambda i, j: (i, j)),
        out_shape=jax.ShapeDtypeStruct((M, N), out_dtype),
        scratch_shapes=[pltpu.VMEM((tm, K), jnp.bfloat16)],  # cached LN(x) in bf16
        compiler_params=pltpu.CompilerParams(
            # j must iterate sequentially per i so the cached xn is valid.
            dimension_semantics=("parallel", "arbitrary"),
            vmem_limit_bytes=VMEM_LIMIT),
        cost_estimate=cost,
    )(x, gamma.reshape(1, K), beta.reshape(1, K), w, b.reshape(1, N))


# ----------------------------------------------------------------------------
# Multi-head attention reading q/k/v directly from the fused [B, Tp, 3D] slab.
# Whole-row (all heads) blocks per grid step; per-head results are written
# straight into o_ref slices (no concat).
# ----------------------------------------------------------------------------
def _attention_kernel(scale, t_real, hpb, dh, split, *refs):
    if split:
        q_ref, k_ref, v_ref, o_ref = refs
        qb = q_ref[0]
        kb = k_ref[0]
        vb = v_ref[0]
    else:
        qkv_ref, o_ref = refs
        D = hpb * dh
        full = qkv_ref[0]
        qb = full[:, :D]
        kb = full[:, D:2 * D]
        vb = full[:, 2 * D:3 * D]

    Tp = qb.shape[0]
    # Mask padded key columns (sequence padded from t_real up to Tp).
    key_valid = jax.lax.broadcasted_iota(jnp.int32, (Tp, Tp), 1) < t_real

    for h in range(hpb):
        sl = slice(h * dh, (h + 1) * dh)
        # q k^T without an explicit transpose: contract last dims of both.
        s = jax.lax.dot_general(
            qb[:, sl], kb[:, sl], (((1,), (1,)), ((), ())),
            preferred_element_type=jnp.float32) * scale
        s = jnp.where(key_valid, s, jnp.float32(-1e30))
        s = s - jnp.max(s, axis=-1, keepdims=True)
        p = jnp.exp(s)
        p = p * pl.reciprocal(jnp.sum(p, axis=-1, keepdims=True), approx=False)
        o = jnp.dot(p.astype(vb.dtype), vb[:, sl],
                    preferred_element_type=jnp.float32)
        o_ref[0, :, sl] = o.astype(o_ref.dtype)


def pallas_attention(qkv, scale, t_real, nheads):
    """qkv: [B, Tp, 3D] head-major ([q | k | v] along last dim) -> [B, Tp, D]."""
    B, Tp, threeD = qkv.shape
    D = threeD // 3
    dh = D // nheads

    # Full-D blocks by default; split heads into 2 lane-dense groups only when
    # B == 1 so both v7x TensorCores still get a 'parallel' block.
    if B >= 2 or nheads % 2 != 0 or (D // 2) % 128 != 0:
        ng = 1
    else:
        ng = 2
    blk = D // ng
    hpb = nheads // ng
    split = (blk % 128 == 0)   # lane-dense offset views are legal

    out_spec = pl.BlockSpec((1, Tp, blk), lambda b, g: (b, 0, g))
    if split:
        in_specs = [
            pl.BlockSpec((1, Tp, blk), lambda b, g: (b, 0, g)),            # q
            pl.BlockSpec((1, Tp, blk), lambda b, g: (b, 0, g + ng)),       # k
            pl.BlockSpec((1, Tp, blk), lambda b, g: (b, 0, g + 2 * ng)),   # v
        ]
        inputs = (qkv, qkv, qkv)
    else:
        # Small-D fallback: fetch the whole qkv row block, slice in-kernel.
        in_specs = [pl.BlockSpec((1, Tp, 3 * D), lambda b, g: (b, 0, 0))]
        inputs = (qkv,)

    return pl.pallas_call(
        functools.partial(_attention_kernel, scale, t_real, hpb, dh, split),
        grid=(B, ng),
        in_specs=in_specs,
        out_specs=out_spec,
        out_shape=jax.ShapeDtypeStruct((B, Tp, D), qkv.dtype),
        compiler_params=pltpu.CompilerParams(
            dimension_semantics=("parallel", "parallel"),
            vmem_limit_bytes=VMEM_LIMIT),
    )(*inputs)


# ----------------------------------------------------------------------------
# Parameter construction (deterministic, synthetic; weights stored in bf16)
# ----------------------------------------------------------------------------
def init_params(key, cfg):
    C, p, D = cfg["in_chans"], cfg["patch"], cfg["dim"]
    T = (cfg["img"] // p) ** 2 + 1  # patches + cls token
    hidden = cfg["mlp_ratio"] * D
    rep = cfg["rep"]

    def nrm(k, shape, scale=0.02):
        return (scale * jax.random.normal(k, shape, dtype=jnp.float32)).astype(jnp.bfloat16)

    keys = jax.random.split(key, 8 + cfg["depth"])
    params = {
        # Conv2d(C, D, p, stride=p) folded into a matmul: [C*p*p, D]
        "patch_w": nrm(keys[0], (C * p * p, D)),
        "patch_b": jnp.zeros((D,), jnp.float32),
        "cls_token": (0.02 * jax.random.normal(keys[1], (1, 1, D))).astype(jnp.float32),
        "pos_embed": (0.02 * jax.random.normal(keys[2], (1, T, D))).astype(jnp.float32),
        "norm_g": jnp.ones((D,), jnp.float32),
        "norm_b": jnp.zeros((D,), jnp.float32),
        # pre_logits head: Linear(D, rep) + Tanh
        "pre_w": nrm(keys[3], (D, rep)),
        "pre_b": jnp.zeros((rep,), jnp.float32),
        "blocks": [],
    }
    for d in range(cfg["depth"]):
        bk = jax.random.split(keys[8 + d], 4)
        params["blocks"].append({
            "ln1_g": jnp.ones((D,), jnp.float32),
            "ln1_b": jnp.zeros((D,), jnp.float32),
            # fused head-major q/k/v projection: [wq | wk | wv]
            "wqkv": nrm(bk[0], (D, 3 * D)),
            "bqkv": jnp.zeros((3 * D,), jnp.float32),
            "proj_w": nrm(bk[1], (D, D)),
            "proj_b": jnp.zeros((D,), jnp.float32),
            "ln2_g": jnp.ones((D,), jnp.float32),
            "ln2_b": jnp.zeros((D,), jnp.float32),
            "fc1_w": nrm(bk[2], (D, hidden)),
            "fc1_b": jnp.zeros((hidden,), jnp.float32),
            "fc2_w": nrm(bk[3], (hidden, D)),
            "fc2_b": jnp.zeros((D,), jnp.float32),
        })
    return params


# ----------------------------------------------------------------------------
# Forward pass (== Vit_backbone.forward == model.forward_features)
# ----------------------------------------------------------------------------
def vit_forward_features(params, x, cfg):
    B, C, H, W = x.shape
    p, D, nheads = cfg["patch"], cfg["dim"], cfg["heads"]
    nH, nW = H // p, W // p
    Np = nH * nW
    dh = D // nheads
    scale = dh ** -0.5

    # PatchEmbed: Conv2d(C, D, kernel=p, stride=p) == matmul on flattened
    # patches (pure layout glue in XLA, runs once per forward).
    patches = (
        x.reshape(B, C, nH, p, nW, p)
        .transpose(0, 2, 4, 1, 3, 5)          # [B, nH, nW, C, p, p]
        .reshape(B * Np, C * p * p)
    )
    tok = pallas_linear(patches, params["patch_w"], params["patch_b"],
                        out_dtype=jnp.float32).reshape(B, Np, D)

    cls = jnp.broadcast_to(params["cls_token"], (B, 1, D))
    xseq = jnp.concatenate([cls, tok], axis=1) + params["pos_embed"]  # [B, T, D]
    T = Np + 1
    Tp = ((T + 7) // 8) * 8                    # pad sequence to sublane multiple
    if Tp != T:
        xseq = jnp.pad(xseq, ((0, 0), (0, Tp - T), (0, 0)))
    M = B * Tp
    x2 = xseq.reshape(M, D)                    # f32 residual stream

    for blk in params["blocks"]:
        # ---- MHSA: LN1 fused into ONE head-major q/k/v projection ----
        qkv = pallas_ln_linear(x2, blk["ln1_g"], blk["ln1_b"],
                               blk["wqkv"], blk["bqkv"],
                               out_dtype=jnp.bfloat16).reshape(B, Tp, 3 * D)
        attn = pallas_attention(qkv, scale, T, nheads).reshape(M, D)
        # proj matmul with residual add fused (output aliases the residual).
        x2 = pallas_linear(attn, blk["proj_w"], blk["proj_b"],
                           residual=x2, out_dtype=jnp.float32)

        # ---- MLP: LN2 + fc1 + GELU fused; fc2 + residual fused ----
        h = pallas_ln_linear(x2, blk["ln2_g"], blk["ln2_b"],
                             blk["fc1_w"], blk["fc1_b"],
                             act="gelu", out_dtype=jnp.bfloat16)
        x2 = pallas_linear(h, blk["fc2_w"], blk["fc2_b"],
                           residual=x2, out_dtype=jnp.float32)

    # Final LayerNorm + pre_logits (Linear + Tanh) on the cls token only
    # (row-wise LN commutes with selecting row 0).
    cls_rows = x2.reshape(B, Tp, D)[:, 0, :]
    feats = pallas_ln_linear(cls_rows, params["norm_g"], params["norm_b"],
                             params["pre_w"], params["pre_b"],
                             act="tanh", out_dtype=jnp.float32)
    return feats


# ----------------------------------------------------------------------------
if __name__ == "__main__":
    # Small-shape stand-in for VisionTransformer(img=224, patch=16, dim=1024,
    # depth=24, heads=16, representation_size=1024).
    cfg = dict(img=16, patch=8, in_chans=3, dim=32, depth=2, heads=4,
               mlp_ratio=4, rep=32)

    key = jax.random.PRNGKey(0)
    k_param, k_x = jax.random.split(key)
    params = init_params(k_param, cfg)

    x = jax.random.normal(k_x, (2, cfg["in_chans"], cfg["img"], cfg["img"]),
                          dtype=jnp.float32)  # NCHW, like the PyTorch module

    fwd = jax.jit(functools.partial(vit_forward_features, cfg=cfg))
    feats = jax.block_until_ready(fwd(params, x))
    assert feats.shape == (2, cfg["rep"]), feats.shape
    assert bool(jnp.all(jnp.isfinite(feats)))
    print("KERNEL_OK")
</pallas_src>

<mosaic_0001>
module attributes {stable_mosaic.version = 11 : i64} {
  func.func @_tiled_linear_kernel(%arg0: i32, %arg1: i32, %arg2: i32, %arg3: memref<8x192xf32, #tpu.memory_space<vmem>>, %arg4: memref<192x32xbf16, #tpu.memory_space<vmem>>, %arg5: memref<1x32xf32, #tpu.memory_space<vmem>>, %arg6: memref<8x32xf32, #tpu.memory_space<vmem>>, %arg7: memref<8x32xf32, #tpu.memory_space<vmem>>) attributes {dimension_semantics = [#tpu.dimension_semantics<parallel>, #tpu.dimension_semantics<parallel>, #tpu.dimension_semantics<arbitrary>], iteration_bounds = array<i64: 1, 1, 1>, scalar_prefetch = 0 : i64, scratch_operands = 1 : i64, tpu.core_type = #tpu.core_type<tc>, window_params = [{transform_indices = @transform_0, window_bounds = array<i64: 8, 192>}, {transform_indices = @transform_1, window_bounds = array<i64: 192, 32>}, {transform_indices = @transform_2, window_bounds = array<i64: 1, 32>}, {transform_indices = @transform_3, window_bounds = array<i64: 8, 32>}]} {
    %c0_i32 = arith.constant 0 : i32
    %0 = arith.cmpi eq, %arg2, %c0_i32 : i32
    %1 = arith.extui %0 : i1 to i32
    %c0_i32_0 = arith.constant 0 : i32
    %2 = arith.cmpi ne, %1, %c0_i32_0 : i32
    scf.if %2 {
      %cst_10 = arith.constant 0.000000e+00 : f32
      %13 = vector.broadcast %cst_10 : f32 to vector<8x32xf32>
      %c0_11 = arith.constant 0 : index
      %c0_12 = arith.constant 0 : index
      %14 = vector.load %arg7[%c0_11, %c0_12] : memref<8x32xf32, #tpu.memory_space<vmem>>, vector<8x32xf32>
      tpu.vector_store %arg7[%c0_11, %c0_12], %13 {strides = array<i32>} : memref<8x32xf32, #tpu.memory_space<vmem>>, vector<8x32xf32>,
    } else {
    }
    %c0 = arith.constant 0 : index
    %c0_1 = arith.constant 0 : index
    %3 = vector.load %arg7[%c0, %c0_1] : memref<8x32xf32, #tpu.memory_space<vmem>>, vector<8x32xf32>
    %c0_2 = arith.constant 0 : index
    %c0_3 = arith.constant 0 : index
    %4 = vector.load %arg3[%c0_2, %c0_3] : memref<8x192xf32, #tpu.memory_space<vmem>>, vector<8x192xf32>
    %5 = arith.truncf %4 : vector<8x192xf32> to vector<8x192xbf16>
    %c0_4 = arith.constant 0 : index
    %c0_5 = arith.constant 0 : index
    %6 = vector.load %arg4[%c0_4, %c0_5] : memref<192x32xbf16, #tpu.memory_space<vmem>>, vector<192x32xbf16>
    %cst = arith.constant dense<0.000000e+00> : vector<8x32xf32>
    %7 = tpu.matmul %5, %6, %cst {dimension_numbers = #tpu.dot_dimension_numbers<[1], [0], [0], [1], [0, 0, 1, 1], [], []>} : vector<8x192xbf16>, vector<192x32xbf16>, vector<8x32xf32> -> vector<8x32xf32>
    %8 = arith.addf %3, %7 : vector<8x32xf32>
    %c0_6 = arith.constant 0 : index
    %c0_7 = arith.constant 0 : index
    %9 = vector.load %arg7[%c0_6, %c0_7] : memref<8x32xf32, #tpu.memory_space<vmem>>, vector<8x32xf32>
    tpu.vector_store %arg7[%c0_6, %c0_7], %8 {strides = array<i32>} : memref<8x32xf32, #tpu.memory_space<vmem>>, vector<8x32xf32>,
    %c0_i32_8 = arith.constant 0 : i32
    %10 = arith.cmpi eq, %arg2, %c0_i32_8 : i32
    %11 = arith.extui %10 : i1 to i32
    %c0_i32_9 = arith.constant 0 : i32
    %12 = arith.cmpi ne, %11, %c0_i32_9 : i32
    scf.if %12 {
      %c0_10 = arith.constant 0 : index
      %c0_11 = arith.constant 0 : index
      %13 = vector.load %arg7[%c0_10, %c0_11] : memref<8x32xf32, #tpu.memory_space<vmem>>, vector<8x32xf32>
      %c0_12 = arith.constant 0 : index
      %c0_13 = arith.constant 0 : index
      %14 = vector.load %arg5[%c0_12, %c0_13] : memref<1x32xf32, #tpu.memory_space<vmem>>, vector<1x32xf32>
      %15 = vector.broadcast %14 : vector<1x32xf32> to vector<8x32xf32>
      %16 = arith.addf %13, %15 : vector<8x32xf32>
      %c0_14 = arith.constant 0 : index
      %c0_15 = arith.constant 0 : index
      %17 = vector.load %arg6[%c0_14, %c0_15] : memref<8x32xf32, #tpu.memory_space<vmem>>, vector<8x32xf32>
      tpu.vector_store %arg6[%c0_14, %c0_15], %16 {strides = array<i32>} : memref<8x32xf32, #tpu.memory_space<vmem>>, vector<8x32xf32>,
    } else {
    }
    return
  }
  func.func @transform_0(%arg0: i32, %arg1: i32, %arg2: i32) -> (i32, i32) {
    %c0_i32 = arith.constant 0 : i32
    return %arg0, %arg2 : i32, i32
  }
  func.func @transform_1(%arg0: i32, %arg1: i32, %arg2: i32) -> (i32, i32) {
    %c0_i32 = arith.constant 0 : i32
    return %arg2, %arg1 : i32, i32
  }
  func.func @transform_2(%arg0: i32, %arg1: i32, %arg2: i32) -> (i32, i32) {
    %c0_i32 = arith.constant 0 : i32
    %c0_i32_0 = arith.constant 0 : i32
    return %c0_i32, %arg1 : i32, i32
  }
  func.func @transform_3(%arg0: i32, %arg1: i32, %arg2: i32) -> (i32, i32) {
    %c0_i32 = arith.constant 0 : i32
    return %arg0, %arg1 : i32, i32
  }
}

module attributes {stable_mosaic.version = 11 : i64} {
  func.func @_attention_kernel(%arg0: i32, %arg1: i32, %arg2: memref<1x8x96xbf16, #tpu.memory_space<vmem>>, %arg3: memref<1x8x32xbf16, #tpu.memory_space<vmem>>) attributes {dimension_semantics = [#tpu.dimension_semantics<parallel>, #tpu.dimension_semantics<parallel>], iteration_bounds = array<i64: 2, 1>, scalar_prefetch = 0 : i64, scratch_operands = 0 : i64, tpu.core_type = #tpu.core_type<tc>, window_params = [{transform_indices = @transform_0, window_bounds = array<i64: 1, 8, 96>}, {transform_indices = @transform_1, window_bounds = array<i64: 1, 8, 32>}]} {
    %c0 = arith.constant 0 : index
    %c0_0 = arith.constant 0 : index
    %c0_1 = arith.constant 0 : index
    %0 = vector.load %arg2[%c0, %c0_0, %c0_1] : memref<1x8x96xbf16, #tpu.memory_space<vmem>>, vector<1x8x96xbf16>
    %1 = vector.shape_cast %0 : vector<1x8x96xbf16> to vector<8x96xbf16>
    %2 = vector.extract_strided_slice %1 {offsets = [0, 0], sizes = [8, 32], strides = [1, 1]} : vector<8x96xbf16> to vector<8x32xbf16>
    %3 = vector.extract_strided_slice %1 {offsets = [0, 32], sizes = [8, 32], strides = [1, 1]} : vector<8x96xbf16> to vector<8x32xbf16>
    %4 = vector.extract_strided_slice %1 {offsets = [0, 64], sizes = [8, 32], strides = [1, 1]} : vector<8x96xbf16> to vector<8x32xbf16>
    %5 = tpu.iota {dimensions = array<i32: 1>} : vector<8x8xi32>
    %c5_i32 = arith.constant 5 : i32
    %6 = vector.broadcast %c5_i32 : i32 to vector<8x8xi32>
    %7 = arith.cmpi slt, %5, %6 : vector<8x8xi32>
    %8 = vector.extract_strided_slice %2 {offsets = [0, 0], sizes = [8, 8], strides = [1, 1]} : vector<8x32xbf16> to vector<8x8xbf16>
    %9 = vector.extract_strided_slice %3 {offsets = [0, 0], sizes = [8, 8], strides = [1, 1]} : vector<8x32xbf16> to vector<8x8xbf16>
    %cst = arith.constant dense<0.000000e+00> : vector<8x8xf32>
    %10 = tpu.matmul %8, %9, %cst {dimension_numbers = #tpu.dot_dimension_numbers<[1], [1], [0], [0], [0, 0, 1, 0], [], []>} : vector<8x8xbf16>, vector<8x8xbf16>, vector<8x8xf32> -> vector<8x8xf32>
    %cst_2 = arith.constant 0.353553385 : f32
    %11 = vector.broadcast %cst_2 : f32 to vector<8x8xf32>
    %12 = arith.mulf %10, %11 : vector<8x8xf32>
    %cst_3 = arith.constant -1.000000e+30 : f32
    %13 = vector.broadcast %cst_3 : f32 to vector<8x8xf32>
    %14 = arith.select %7, %12, %13 : vector<8x8xi1>, vector<8x8xf32>
    %cst_4 = arith.constant dense<0xFF800000> : vector<8xf32>
    %15 = vector.multi_reduction <maximumf>, %14, %cst_4 [1] : vector<8x8xf32> to vector<8xf32>
    %16 = vector.shape_cast %15 : vector<8xf32> to vector<8x1xf32>
    %17 = vector.broadcast %16 : vector<8x1xf32> to vector<8x8xf32>
    %18 = arith.subf %14, %17 : vector<8x8xf32>
    %19 = math.exp %18 : vector<8x8xf32>
    %cst_5 = arith.constant dense<0.000000e+00> : vector<8xf32>
    %20 = vector.multi_reduction <add>, %19, %cst_5 [1] : vector<8x8xf32> to vector<8xf32>
    %21 = vector.shape_cast %20 : vector<8xf32> to vector<8x1xf32>
    %22 = tpu.reciprocal %21 : vector<8x1xf32> -> vector<8x1xf32>
    %23 = vector.broadcast %22 : vector<8x1xf32> to vector<8x8xf32>
    %24 = arith.mulf %19, %23 : vector<8x8xf32>
    %25 = arith.truncf %24 : vector<8x8xf32> to vector<8x8xbf16>
    %26 = vector.extract_strided_slice %4 {offsets = [0, 0], sizes = [8, 8], strides = [1, 1]} : vector<8x32xbf16> to vector<8x8xbf16>
    %cst_6 = arith.constant dense<0.000000e+00> : vector<8x8xf32>
    %27 = tpu.matmul %25, %26, %cst_6 {dimension_numbers = #tpu.dot_dimension_numbers<[1], [0], [0], [1], [0, 0, 1, 1], [], []>} : vector<8x8xbf16>, vector<8x8xbf16>, vector<8x8xf32> -> vector<8x8xf32>
    %28 = arith.truncf %27 : vector<8x8xf32> to vector<8x8xbf16>
    %c0_7 = arith.constant 0 : index
    %c0_8 = arith.constant 0 : index
    %c0_9 = arith.constant 0 : index
    %29 = vector.load %arg3[%c0_7, %c0_8, %c0_9] : memref<1x8x32xbf16, #tpu.memory_space<vmem>>, vector<1x8x8xbf16>
    %30 = vector.shape_cast %29 : vector<1x8x8xbf16> to vector<8x8xbf16>
    %31 = vector.shape_cast %28 : vector<8x8xbf16> to vector<1x8x8xbf16>
    tpu.vector_store %arg3[%c0_7, %c0_8, %c0_9], %31 {strides = array<i32>} : memref<1x8x32xbf16, #tpu.memory_space<vmem>>, vector<1x8x8xbf16>,
    %32 = vector.extract_strided_slice %2 {offsets = [0, 8], sizes = [8, 8], strides = [1, 1]} : vector<8x32xbf16> to vector<8x8xbf16>
    %33 = vector.extract_strided_slice %3 {offsets = [0, 8], sizes = [8, 8], strides = [1, 1]} : vector<8x32xbf16> to vector<8x8xbf16>
    %cst_10 = arith.constant dense<0.000000e+00> : vector<8x8xf32>
    %34 = tpu.matmul %32, %33, %cst_10 {dimension_numbers = #tpu.dot_dimension_numbers<[1], [1], [0], [0], [0, 0, 1, 0], [], []>} : vector<8x8xbf16>, vector<8x8xbf16>, vector<8x8xf32> -> vector<8x8xf32>
    %cst_11 = arith.constant 0.353553385 : f32
    %35 = vector.broadcast %cst_11 : f32 to vector<8x8xf32>
    %36 = arith.mulf %34, %35 : vector<8x8xf32>
    %cst_12 = arith.constant -1.000000e+30 : f32
    %37 = vector.broadcast %cst_12 : f32 to vector<8x8xf32>
    %38 = arith.select %7, %36, %37 : vector<8x8xi1>, vector<8x8xf32>
    %cst_13 = arith.constant dense<0xFF800000> : vector<8xf32>
    %39 = vector.multi_reduction <maximumf>, %38, %cst_13 [1] : vector<8x8xf32> to vector<8xf32>
    %40 = vector.shape_cast %39 : vector<8xf32> to vector<8x1xf32>
    %41 = vector.broadcast %40 : vector<8x1xf32> to vector<8x8xf32>
    %42 = arith.subf %38, %41 : vector<8x8xf32>
    %43 = math.exp %42 : vector<8x8xf32>
    %cst_14 = arith.constant dense<0.000000e+00> : vector<8xf32>
    %44 = vector.multi_reduction <add>, %43, %cst_14 [1] : vector<8x8xf32> to vector<8xf32>
    %45 = vector.shape_cast %44 : vector<8xf32> to vector<8x1xf32>
    %46 = tpu.reciprocal %45 : vector<8x1xf32> -> vector<8x1xf32>
    %47 = vector.broadcast %46 : vector<8x1xf32> to vector<8x8xf32>
    %48 = arith.mulf %43, %47 : vector<8x8xf32>
    %49 = arith.truncf %48 : vector<8x8xf32> to vector<8x8xbf16>
    %50 = vector.extract_strided_slice %4 {offsets = [0, 8], sizes = [8, 8], strides = [1, 1]} : vector<8x32xbf16> to vector<8x8xbf16>
    %cst_15 = arith.constant dense<0.000000e+00> : vector<8x8xf32>
    %51 = tpu.matmul %49, %50, %cst_15 {dimension_numbers = #tpu.dot_dimension_numbers<[1], [0], [0], [1], [0, 0, 1, 1], [], []>} : vector<8x8xbf16>, vector<8x8xbf16>, vector<8x8xf32> -> vector<8x8xf32>
    %52 = arith.truncf %51 : vector<8x8xf32> to vector<8x8xbf16>
    %c0_16 = arith.constant 0 : index
    %c0_17 = arith.constant 0 : index
    %c8 = arith.constant 8 : index
    %53 = vector.load %arg3[%c0_16, %c0_17, %c8] : memref<1x8x32xbf16, #tpu.memory_space<vmem>>, vector<1x8x8xbf16>
    %54 = vector.shape_cast %53 : vector<1x8x8xbf16> to vector<8x8xbf16>
    %55 = vector.shape_cast %52 : vector<8x8xbf16> to vector<1x8x8xbf16>
    tpu.vector_store %arg3[%c0_16, %c0_17, %c8], %55 {strides = array<i32>} : memref<1x8x32xbf16, #tpu.memory_space<vmem>>, vector<1x8x8xbf16>,
    %56 = vector.extract_strided_slice %2 {offsets = [0, 16], sizes = [8, 8], strides = [1, 1]} : vector<8x32xbf16> to vector<8x8xbf16>
    %57 = vector.extract_strided_slice %3 {offsets = [0, 16], sizes = [8, 8], strides = [1, 1]} : vector<8x32xbf16> to vector<8x8xbf16>
    %cst_18 = arith.constant dense<0.000000e+00> : vector<8x8xf32>
    %58 = tpu.matmul %56, %57, %cst_18 {dimension_numbers = #tpu.dot_dimension_numbers<[1], [1], [0], [0], [0, 0, 1, 0], [], []>} : vector<8x8xbf16>, vector<8x8xbf16>, vector<8x8xf32> -> vector<8x8xf32>
    %cst_19 = arith.constant 0.353553385 : f32
    %59 = vector.broadcast %cst_19 : f32 to vector<8x8xf32>
    %60 = arith.mulf %58, %59 : vector<8x8xf32>
    %cst_20 = arith.constant -1.000000e+30 : f32
    %61 = vector.broadcast %cst_20 : f32 to vector<8x8xf32>
    %62 = arith.select %7, %60, %61 : vector<8x8xi1>, vector<8x8xf32>
    %cst_21 = arith.constant dense<0xFF800000> : vector<8xf32>
    %63 = vector.multi_reduction <maximumf>, %62, %cst_21 [1] : vector<8x8xf32> to vector<8xf32>
    %64 = vector.shape_cast %63 : vector<8xf32> to vector<8x1xf32>
    %65 = vector.broadcast %64 : vector<8x1xf32> to vector<8x8xf32>
    %66 = arith.subf %62, %65 : vector<8x8xf32>
    %67 = math.exp %66 : vector<8x8xf32>
    %cst_22 = arith.constant dense<0.000000e+00> : vector<8xf32>
    %68 = vector.multi_reduction <add>, %67, %cst_22 [1] : vector<8x8xf32> to vector<8xf32>
    %69 = vector.shape_cast %68 : vector<8xf32> to vector<8x1xf32>
    %70 = tpu.reciprocal %69 : vector<8x1xf32> -> vector<8x1xf32>
    %71 = vector.broadcast %70 : vector<8x1xf32> to vector<8x8xf32>
    %72 = arith.mulf %67, %71 : vector<8x8xf32>
    %73 = arith.truncf %72 : vector<8x8xf32> to vector<8x8xbf16>
    %74 = vector.extract_strided_slice %4 {offsets = [0, 16], sizes = [8, 8], strides = [1, 1]} : vector<8x32xbf16> to vector<8x8xbf16>
    %cst_23 = arith.constant dense<0.000000e+00> : vector<8x8xf32>
    %75 = tpu.matmul %73, %74, %cst_23 {dimension_numbers = #tpu.dot_dimension_numbers<[1], [0], [0], [1], [0, 0, 1, 1], [], []>} : vector<8x8xbf16>, vector<8x8xbf16>, vector<8x8xf32> -> vector<8x8xf32>
    %76 = arith.truncf %75 : vector<8x8xf32> to vector<8x8xbf16>
    %c0_24 = arith.constant 0 : index
    %c0_25 = arith.constant 0 : index
    %c16 = arith.constant 16 : index
    %77 = vector.load %arg3[%c0_24, %c0_25, %c16] : memref<1x8x32xbf16, #tpu.memory_space<vmem>>, vector<1x8x8xbf16>
    %78 = vector.shape_cast %77 : vector<1x8x8xbf16> to vector<8x8xbf16>
    %79 = vector.shape_cast %76 : vector<8x8xbf16> to vector<1x8x8xbf16>
    tpu.vector_store %arg3[%c0_24, %c0_25, %c16], %79 {strides = array<i32>} : memref<1x8x32xbf16, #tpu.memory_space<vmem>>, vector<1x8x8xbf16>,
    %80 = vector.extract_strided_slice %2 {offsets = [0, 24], sizes = [8, 8], strides = [1, 1]} : vector<8x32xbf16> to vector<8x8xbf16>
    %81 = vector.extract_strided_slice %3 {offsets = [0, 24], sizes = [8, 8], strides = [1, 1]} : vector<8x32xbf16> to vector<8x8xbf16>
    %cst_26 = arith.constant dense<0.000000e+00> : vector<8x8xf32>
    %82 = tpu.matmul %80, %81, %cst_26 {dimension_numbers = #tpu.dot_dimension_numbers<[1], [1], [0], [0], [0, 0, 1, 0], [], []>} : vector<8x8xbf16>, vector<8x8xbf16>, vector<8x8xf32> -> vector<8x8xf32>
    %cst_27 = arith.constant 0.353553385 : f32
    %83 = vector.broadcast %cst_27 : f32 to vector<8x8xf32>
    %84 = arith.mulf %82, %83 : vector<8x8xf32>
    %cst_28 = arith.constant -1.000000e+30 : f32
    %85 = vector.broadcast %cst_28 : f32 to vector<8x8xf32>
    %86 = arith.select %7, %84, %85 : vector<8x8xi1>, vector<8x8xf32>
    %cst_29 = arith.constant dense<0xFF800000> : vector<8xf32>
    %87 = vector.multi_reduction <maximumf>, %86, %cst_29 [1] : vector<8x8xf32> to vector<8xf32>
    %88 = vector.shape_cast %87 : vector<8xf32> to vector<8x1xf32>
    %89 = vector.broadcast %88 : vector<8x1xf32> to vector<8x8xf32>
    %90 = arith.subf %86, %89 : vector<8x8xf32>
    %91 = math.exp %90 : vector<8x8xf32>
    %cst_30 = arith.constant dense<0.000000e+00> : vector<8xf32>
    %92 = vector.multi_reduction <add>, %91, %cst_30 [1] : vector<8x8xf32> to vector<8xf32>
    %93 = vector.shape_cast %92 : vector<8xf32> to vector<8x1xf32>
    %94 = tpu.reciprocal %93 : vector<8x1xf32> -> vector<8x1xf32>
    %95 = vector.broadcast %94 : vector<8x1xf32> to vector<8x8xf32>
    %96 = arith.mulf %91, %95 : vector<8x8xf32>
    %97 = arith.truncf %96 : vector<8x8xf32> to vector<8x8xbf16>
    %98 = vector.extract_strided_slice %4 {offsets = [0, 24], sizes = [8, 8], strides = [1, 1]} : vector<8x32xbf16> to vector<8x8xbf16>
    %cst_31 = arith.constant dense<0.000000e+00> : vector<8x8xf32>
    %99 = tpu.matmul %97, %98, %cst_31 {dimension_numbers = #tpu.dot_dimension_numbers<[1], [0], [0], [1], [0, 0, 1, 1], [], []>} : vector<8x8xbf16>, vector<8x8xbf16>, vector<8x8xf32> -> vector<8x8xf32>
    %100 = arith.truncf %99 : vector<8x8xf32> to vector<8x8xbf16>
    %c0_32 = arith.constant 0 : index
    %c0_33 = arith.constant 0 : index
    %c24 = arith.constant 24 : index
    %101 = vector.load %arg3[%c0_32, %c0_33, %c24] : memref<1x8x32xbf16, #tpu.memory_space<vmem>>, vector<1x8x8xbf16>
    %102 = vector.shape_cast %101 : vector<1x8x8xbf16> to vector<8x8xbf16>
    %103 = vector.shape_cast %100 : vector<8x8xbf16> to vector<1x8x8xbf16>
    tpu.vector_store %arg3[%c0_32, %c0_33, %c24], %103 {strides = array<i32>} : memref<1x8x32xbf16, #tpu.memory_space<vmem>>, vector<1x8x8xbf16>,
    return
  }
  func.func @transform_0(%arg0: i32, %arg1: i32) -> (i32, i32, i32) {
    %c0_i32 = arith.constant 0 : i32
    %c0_i32_0 = arith.constant 0 : i32
    %c0_i32_1 = arith.constant 0 : i32
    return %arg0, %c0_i32, %c0_i32_0 : i32, i32, i32
  }
  func.func @transform_1(%arg0: i32, %arg1: i32) -> (i32, i32, i32) {
    %c0_i32 = arith.constant 0 : i32
    %c0_i32_0 = arith.constant 0 : i32
    return %arg0, %c0_i32, %arg1 : i32, i32, i32
  }
}

module attributes {stable_mosaic.version = 11 : i64} {
  func.func @_ln_linear_kernel(%arg0: i32, %arg1: i32, %arg2: memref<16x32xf32, #tpu.memory_space<vmem>>, %arg3: memref<1x32xf32, #tpu.memory_space<vmem>>, %arg4: memref<1x32xf32, #tpu.memory_space<vmem>>, %arg5: memref<32x96xbf16, #tpu.memory_space<vmem>>, %arg6: memref<1x96xf32, #tpu.memory_space<vmem>>, %arg7: memref<16x96xbf16, #tpu.memory_space<vmem>>, %arg8: memref<16x32xbf16, #tpu.memory_space<vmem>>) attributes {dimension_semantics = [#tpu.dimension_semantics<parallel>, #tpu.dimension_semantics<arbitrary>], iteration_bounds = array<i64: 1, 1>, scalar_prefetch = 0 : i64, scratch_operands = 1 : i64, tpu.core_type = #tpu.core_type<tc>, window_params = [{transform_indices = @transform_0, window_bounds = array<i64: 16, 32>}, {pipeline_mode = #tpu.pipeline_mode<synchronous>, transform_indices = @transform_1, window_bounds = array<i64: 1, 32>}, {pipeline_mode = #tpu.pipeline_mode<synchronous>, transform_indices = @transform_2, window_bounds = array<i64: 1, 32>}, {transform_indices = @transform_3, window_bounds = array<i64: 32, 96>}, {transform_indices = @transform_4, window_bounds = array<i64: 1, 96>}, {transform_indices = @transform_5, window_bounds = array<i64: 16, 96>}]} {
    %c0_i32 = arith.constant 0 : i32
    %0 = arith.cmpi eq, %arg1, %c0_i32 : i32
    %1 = arith.extui %0 : i1 to i32
    %c0_i32_0 = arith.constant 0 : i32
    %2 = arith.cmpi ne, %1, %c0_i32_0 : i32
    scf.if %2 {
      %c0_8 = arith.constant 0 : index
      %c0_9 = arith.constant 0 : index
      %11 = vector.load %arg2[%c0_8, %c0_9] : memref<16x32xf32, #tpu.memory_space<vmem>>, vector<16x32xf32>
      %cst_10 = arith.constant dense<0.000000e+00> : vector<16xf32>
      %12 = vector.multi_reduction <add>, %11, %cst_10 [1] : vector<16x32xf32> to vector<16xf32>
      %13 = vector.shape_cast %12 : vector<16xf32> to vector<16x1xf32>
      %cst_11 = arith.constant 3.200000e+01 : f32
      %14 = vector.broadcast %cst_11 : f32 to vector<16x1xf32>
      %15 = arith.divf %13, %14 : vector<16x1xf32>
      %16 = vector.broadcast %15 : vector<16x1xf32> to vector<16x32xf32>
      %17 = arith.subf %11, %16 : vector<16x32xf32>
      %18 = arith.mulf %17, %17 : vector<16x32xf32>
      %cst_12 = arith.constant dense<0.000000e+00> : vector<16xf32>
      %19 = vector.multi_reduction <add>, %18, %cst_12 [1] : vector<16x32xf32> to vector<16xf32>
      %20 = vector.shape_cast %19 : vector<16xf32> to vector<16x1xf32>
      %cst_13 = arith.constant 3.200000e+01 : f32
      %21 = vector.broadcast %cst_13 : f32 to vector<16x1xf32>
      %22 = arith.divf %20, %21 : vector<16x1xf32>
      %23 = vector.broadcast %15 : vector<16x1xf32> to vector<16x32xf32>
      %24 = arith.subf %11, %23 : vector<16x32xf32>
      %cst_14 = arith.constant 9.99999997E-7 : f32
      %25 = vector.broadcast %cst_14 : f32 to vector<16x1xf32>
      %26 = arith.addf %22, %25 : vector<16x1xf32>
      %27 = math.rsqrt %26 : vector<16x1xf32>
      %28 = vector.broadcast %27 : vector<16x1xf32> to vector<16x32xf32>
      %29 = arith.mulf %24, %28 : vector<16x32xf32>
      %c0_15 = arith.constant 0 : index
      %c0_16 = arith.constant 0 : index
      %30 = vector.load %arg3[%c0_15, %c0_16] : memref<1x32xf32, #tpu.memory_space<vmem>>, vector<1x32xf32>
      %31 = vector.broadcast %30 : vector<1x32xf32> to vector<16x32xf32>
      %32 = arith.mulf %29, %31 : vector<16x32xf32>
      %c0_17 = arith.constant 0 : index
      %c0_18 = arith.constant 0 : index
      %33 = vector.load %arg4[%c0_17, %c0_18] : memref<1x32xf32, #tpu.memory_space<vmem>>, vector<1x32xf32>
      %34 = vector.broadcast %33 : vector<1x32xf32> to vector<16x32xf32>
      %35 = arith.addf %32, %34 : vector<16x32xf32>
      %36 = arith.truncf %35 : vector<16x32xf32> to vector<16x32xbf16>
      %c0_19 = arith.constant 0 : index
      %c0_20 = arith.constant 0 : index
      %37 = vector.load %arg8[%c0_19, %c0_20] : memref<16x32xbf16, #tpu.memory_space<vmem>>, vector<16x32xbf16>
      tpu.vector_store %arg8[%c0_19, %c0_20], %36 {strides = array<i32>} : memref<16x32xbf16, #tpu.memory_space<vmem>>, vector<16x32xbf16>,
    } else {
    }
    %c0 = arith.constant 0 : index
    %c0_1 = arith.constant 0 : index
    %3 = vector.load %arg8[%c0, %c0_1] : memref<16x32xbf16, #tpu.memory_space<vmem>>, vector<16x32xbf16>
    %c0_2 = arith.constant 0 : index
    %c0_3 = arith.constant 0 : index
    %4 = vector.load %arg5[%c0_2, %c0_3] : memref<32x96xbf16, #tpu.memory_space<vmem>>, vector<32x96xbf16>
    %cst = arith.constant dense<0.000000e+00> : vector<16x96xf32>
    %5 = tpu.matmul %3, %4, %cst {dimension_numbers = #tpu.dot_dimension_numbers<[1], [0], [0], [1], [0, 0, 1, 1], [], []>} : vector<16x32xbf16>, vector<32x96xbf16>, vector<16x96xf32> -> vector<16x96xf32>
    %c0_4 = arith.constant 0 : index
    %c0_5 = arith.constant 0 : index
    %6 = vector.load %arg6[%c0_4, %c0_5] : memref<1x96xf32, #tpu.memory_space<vmem>>, vector<1x96xf32>
    %7 = vector.broadcast %6 : vector<1x96xf32> to vector<16x96xf32>
    %8 = arith.addf %5, %7 : vector<16x96xf32>
    %9 = arith.truncf %8 : vector<16x96xf32> to vector<16x96xbf16>
    %c0_6 = arith.constant 0 : index
    %c0_7 = arith.constant 0 : index
    %10 = vector.load %arg7[%c0_6, %c0_7] : memref<16x96xbf16, #tpu.memory_space<vmem>>, vector<16x96xbf16>
    tpu.vector_store %arg7[%c0_6, %c0_7], %9 {strides = array<i32>} : memref<16x96xbf16, #tpu.memory_space<vmem>>, vector<16x96xbf16>,
    return
  }
  func.func @transform_0(%arg0: i32, %arg1: i32) -> (i32, i32) {
    %c0_i32 = arith.constant 0 : i32
    %c0_i32_0 = arith.constant 0 : i32
    return %arg0, %c0_i32 : i32, i32
  }
  func.func @transform_1(%arg0: i32, %arg1: i32) -> (i32, i32) {
    %c0_i32 = arith.constant 0 : i32
    %c0_i32_0 = arith.constant 0 : i32
    %c0_i32_1 = arith.constant 0 : i32
    return %c0_i32, %c0_i32_0 : i32, i32
  }
  func.func @transform_2(%arg0: i32, %arg1: i32) -> (i32, i32) {
    %c0_i32 = arith.constant 0 : i32
    %c0_i32_0 = arith.constant 0 : i32
    %c0_i32_1 = arith.constant 0 : i32
    return %c0_i32, %c0_i32_0 : i32, i32
  }
  func.func @transform_3(%arg0: i32, %arg1: i32) -> (i32, i32) {
    %c0_i32 = arith.constant 0 : i32
    %c0_i32_0 = arith.constant 0 : i32
    return %c0_i32, %arg1 : i32, i32
  }
  func.func @transform_4(%arg0: i32, %arg1: i32) -> (i32, i32) {
    %c0_i32 = arith.constant 0 : i32
    %c0_i32_0 = arith.constant 0 : i32
    return %c0_i32, %arg1 : i32, i32
  }
  func.func @transform_5(%arg0: i32, %arg1: i32) -> (i32, i32) {
    %c0_i32 = arith.constant 0 : i32
    return %arg0, %arg1 : i32, i32
  }
}

module attributes {stable_mosaic.version = 11 : i64} {
  func.func @_tiled_linear_kernel(%arg0: i32, %arg1: i32, %arg2: i32, %arg3: memref<16x32xbf16, #tpu.memory_space<vmem>>, %arg4: memref<32x32xbf16, #tpu.memory_space<vmem>>, %arg5: memref<1x32xf32, #tpu.memory_space<vmem>>, %arg6: memref<16x32xf32, #tpu.memory_space<vmem>>, %arg7: memref<16x32xf32, #tpu.memory_space<vmem>>, %arg8: memref<16x32xf32, #tpu.memory_space<vmem>>) attributes {dimension_semantics = [#tpu.dimension_semantics<parallel>, #tpu.dimension_semantics<parallel>, #tpu.dimension_semantics<arbitrary>], iteration_bounds = array<i64: 1, 1, 1>, scalar_prefetch = 0 : i64, scratch_operands = 1 : i64, tpu.core_type = #tpu.core_type<tc>, window_params = [{transform_indices = @transform_0, window_bounds = array<i64: 16, 32>}, {transform_indices = @transform_1, window_bounds = array<i64: 32, 32>}, {transform_indices = @transform_2, window_bounds = array<i64: 1, 32>}, {transform_indices = @transform_3, window_bounds = array<i64: 16, 32>}, {transform_indices = @transform_4, window_bounds = array<i64: 16, 32>}]} {
    %c0_i32 = arith.constant 0 : i32
    %0 = arith.cmpi eq, %arg2, %c0_i32 : i32
    %1 = arith.extui %0 : i1 to i32
    %c0_i32_0 = arith.constant 0 : i32
    %2 = arith.cmpi ne, %1, %c0_i32_0 : i32
    scf.if %2 {
      %cst_10 = arith.constant 0.000000e+00 : f32
      %12 = vector.broadcast %cst_10 : f32 to vector<16x32xf32>
      %c0_11 = arith.constant 0 : index
      %c0_12 = arith.constant 0 : index
      %13 = vector.load %arg8[%c0_11, %c0_12] : memref<16x32xf32, #tpu.memory_space<vmem>>, vector<16x32xf32>
      tpu.vector_store %arg8[%c0_11, %c0_12], %12 {strides = array<i32>} : memref<16x32xf32, #tpu.memory_space<vmem>>, vector<16x32xf32>,
    } else {
    }
    %c0 = arith.constant 0 : index
    %c0_1 = arith.constant 0 : index
    %3 = vector.load %arg8[%c0, %c0_1] : memref<16x32xf32, #tpu.memory_space<vmem>>, vector<16x32xf32>
    %c0_2 = arith.constant 0 : index
    %c0_3 = arith.constant 0 : index
    %4 = vector.load %arg3[%c0_2, %c0_3] : memref<16x32xbf16, #tpu.memory_space<vmem>>, vector<16x32xbf16>
    %c0_4 = arith.constant 0 : index
    %c0_5 = arith.constant 0 : index
    %5 = vector.load %arg4[%c0_4, %c0_5] : memref<32x32xbf16, #tpu.memory_space<vmem>>, vector<32x32xbf16>
    %cst = arith.constant dense<0.000000e+00> : vector<16x32xf32>
    %6 = tpu.matmul %4, %5, %cst {dimension_numbers = #tpu.dot_dimension_numbers<[1], [0], [0], [1], [0, 0, 1, 1], [], []>} : vector<16x32xbf16>, vector<32x32xbf16>, vector<16x32xf32> -> vector<16x32xf32>
    %7 = arith.addf %3, %6 : vector<16x32xf32>
    %c0_6 = arith.constant 0 : index
    %c0_7 = arith.constant 0 : index
    %8 = vector.load %arg8[%c0_6, %c0_7] : memref<16x32xf32, #tpu.memory_space<vmem>>, vector<16x32xf32>
    tpu.vector_store %arg8[%c0_6, %c0_7], %7 {strides = array<i32>} : memref<16x32xf32, #tpu.memory_space<vmem>>, vector<16x32xf32>,
    %c0_i32_8 = arith.constant 0 : i32
    %9 = arith.cmpi eq, %arg2, %c0_i32_8 : i32
    %10 = arith.extui %9 : i1 to i32
    %c0_i32_9 = arith.constant 0 : i32
    %11 = arith.cmpi ne, %10, %c0_i32_9 : i32
    scf.if %11 {
      %c0_10 = arith.constant 0 : index
      %c0_11 = arith.constant 0 : index
      %12 = vector.load %arg8[%c0_10, %c0_11] : memref<16x32xf32, #tpu.memory_space<vmem>>, vector<16x32xf32>
      %c0_12 = arith.constant 0 : index
      %c0_13 = arith.constant 0 : index
      %13 = vector.load %arg5[%c0_12, %c0_13] : memref<1x32xf32, #tpu.memory_space<vmem>>, vector<1x32xf32>
      %14 = vector.broadcast %13 : vector<1x32xf32> to vector<16x32xf32>
      %15 = arith.addf %12, %14 : vector<16x32xf32>
      %c0_14 = arith.constant 0 : index
      %c0_15 = arith.constant 0 : index
      %16 = vector.load %arg6[%c0_14, %c0_15] : memref<16x32xf32, #tpu.memory_space<vmem>>, vector<16x32xf32>
      %17 = arith.addf %15, %16 : vector<16x32xf32>
      %c0_16 = arith.constant 0 : index
      %c0_17 = arith.constant 0 : index
      %18 = vector.load %arg7[%c0_16, %c0_17] : memref<16x32xf32, #tpu.memory_space<vmem>>, vector<16x32xf32>
      tpu.vector_store %arg7[%c0_16, %c0_17], %17 {strides = array<i32>} : memref<16x32xf32, #tpu.memory_space<vmem>>, vector<16x32xf32>,
    } else {
    }
    return
  }
  func.func @transform_0(%arg0: i32, %arg1: i32, %arg2: i32) -> (i32, i32) {
    %c0_i32 = arith.constant 0 : i32
    return %arg0, %arg2 : i32, i32
  }
  func.func @transform_1(%arg0: i32, %arg1: i32, %arg2: i32) -> (i32, i32) {
    %c0_i32 = arith.constant 0 : i32
    return %arg2, %arg1 : i32, i32
  }
  func.func @transform_2(%arg0: i32, %arg1: i32, %arg2: i32) -> (i32, i32) {
    %c0_i32 = arith.constant 0 : i32
    %c0_i32_0 = arith.constant 0 : i32
    return %c0_i32, %arg1 : i32, i32
  }
  func.func @transform_3(%arg0: i32, %arg1: i32, %arg2: i32) -> (i32, i32) {
    %c0_i32 = arith.constant 0 : i32
    return %arg0, %arg1 : i32, i32
  }
  func.func @transform_4(%arg0: i32, %arg1: i32, %arg2: i32) -> (i32, i32) {
    %c0_i32 = arith.constant 0 : i32
    return %arg0, %arg1 : i32, i32
  }
}

module attributes {stable_mosaic.version = 11 : i64} {
  func.func @_tiled_linear_kernel(%arg0: i32, %arg1: i32, %arg2: i32, %arg3: memref<16x128xbf16, #tpu.memory_space<vmem>>, %arg4: memref<128x32xbf16, #tpu.memory_space<vmem>>, %arg5: memref<1x32xf32, #tpu.memory_space<vmem>>, %arg6: memref<16x32xf32, #tpu.memory_space<vmem>>, %arg7: memref<16x32xf32, #tpu.memory_space<vmem>>, %arg8: memref<16x32xf32, #tpu.memory_space<vmem>>) attributes {dimension_semantics = [#tpu.dimension_semantics<parallel>, #tpu.dimension_semantics<parallel>, #tpu.dimension_semantics<arbitrary>], iteration_bounds = array<i64: 1, 1, 1>, scalar_prefetch = 0 : i64, scratch_operands = 1 : i64, tpu.core_type = #tpu.core_type<tc>, window_params = [{transform_indices = @transform_0, window_bounds = array<i64: 16, 128>}, {transform_indices = @transform_1, window_bounds = array<i64: 128, 32>}, {transform_indices = @transform_2, window_bounds = array<i64: 1, 32>}, {transform_indices = @transform_3, window_bounds = array<i64: 16, 32>}, {transform_indices = @transform_4, window_bounds = array<i64: 16, 32>}]} {
    %c0_i32 = arith.constant 0 : i32
    %0 = arith.cmpi eq, %arg2, %c0_i32 : i32
    %1 = arith.extui %0 : i1 to i32
    %c0_i32_0 = arith.constant 0 : i32
    %2 = arith.cmpi ne, %1, %c0_i32_0 : i32
    scf.if %2 {
      %cst_10 = arith.constant 0.000000e+00 : f32
      %12 = vector.broadcast %cst_10 : f32 to vector<16x32xf32>
      %c0_11 = arith.constant 0 : index
      %c0_12 = arith.constant 0 : index
      %13 = vector.load %arg8[%c0_11, %c0_12] : memref<16x32xf32, #tpu.memory_space<vmem>>, vector<16x32xf32>
      tpu.vector_store %arg8[%c0_11, %c0_12], %12 {strides = array<i32>} : memref<16x32xf32, #tpu.memory_space<vmem>>, vector<16x32xf32>,
    } else {
    }
    %c0 = arith.constant 0 : index
    %c0_1 = arith.constant 0 : index
    %3 = vector.load %arg8[%c0, %c0_1] : memref<16x32xf32, #tpu.memory_space<vmem>>, vector<16x32xf32>
    %c0_2 = arith.constant 0 : index
    %c0_3 = arith.constant 0 : index
    %4 = vector.load %arg3[%c0_2, %c0_3] : memref<16x128xbf16, #tpu.memory_space<vmem>>, vector<16x128xbf16>
    %c0_4 = arith.constant 0 : index
    %c0_5 = arith.constant 0 : index
    %5 = vector.load %arg4[%c0_4, %c0_5] : memref<128x32xbf16, #tpu.memory_space<vmem>>, vector<128x32xbf16>
    %cst = arith.constant dense<0.000000e+00> : vector<16x32xf32>
    %6 = tpu.matmul %4, %5, %cst {dimension_numbers = #tpu.dot_dimension_numbers<[1], [0], [0], [1], [0, 0, 1, 1], [], []>} : vector<16x128xbf16>, vector<128x32xbf16>, vector<16x32xf32> -> vector<16x32xf32>
    %7 = arith.addf %3, %6 : vector<16x32xf32>
    %c0_6 = arith.constant 0 : index
    %c0_7 = arith.constant 0 : index
    %8 = vector.load %arg8[%c0_6, %c0_7] : memref<16x32xf32, #tpu.memory_space<vmem>>, vector<16x32xf32>
    tpu.vector_store %arg8[%c0_6, %c0_7], %7 {strides = array<i32>} : memref<16x32xf32, #tpu.memory_space<vmem>>, vector<16x32xf32>,
    %c0_i32_8 = arith.constant 0 : i32
    %9 = arith.cmpi eq, %arg2, %c0_i32_8 : i32
    %10 = arith.extui %9 : i1 to i32
    %c0_i32_9 = arith.constant 0 : i32
    %11 = arith.cmpi ne, %10, %c0_i32_9 : i32
    scf.if %11 {
      %c0_10 = arith.constant 0 : index
      %c0_11 = arith.constant 0 : index
      %12 = vector.load %arg8[%c0_10, %c0_11] : memref<16x32xf32, #tpu.memory_space<vmem>>, vector<16x32xf32>
      %c0_12 = arith.constant 0 : index
      %c0_13 = arith.constant 0 : index
      %13 = vector.load %arg5[%c0_12, %c0_13] : memref<1x32xf32, #tpu.memory_space<vmem>>, vector<1x32xf32>
      %14 = vector.broadcast %13 : vector<1x32xf32> to vector<16x32xf32>
      %15 = arith.addf %12, %14 : vector<16x32xf32>
      %c0_14 = arith.constant 0 : index
      %c0_15 = arith.constant 0 : index
      %16 = vector.load %arg6[%c0_14, %c0_15] : memref<16x32xf32, #tpu.memory_space<vmem>>, vector<16x32xf32>
      %17 = arith.addf %15, %16 : vector<16x32xf32>
      %c0_16 = arith.constant 0 : index
      %c0_17 = arith.constant 0 : index
      %18 = vector.load %arg7[%c0_16, %c0_17] : memref<16x32xf32, #tpu.memory_space<vmem>>, vector<16x32xf32>
      tpu.vector_store %arg7[%c0_16, %c0_17], %17 {strides = array<i32>} : memref<16x32xf32, #tpu.memory_space<vmem>>, vector<16x32xf32>,
    } else {
    }
    return
  }
  func.func @transform_0(%arg0: i32, %arg1: i32, %arg2: i32) -> (i32, i32) {
    %c0_i32 = arith.constant 0 : i32
    return %arg0, %arg2 : i32, i32
  }
  func.func @transform_1(%arg0: i32, %arg1: i32, %arg2: i32) -> (i32, i32) {
    %c0_i32 = arith.constant 0 : i32
    return %arg2, %arg1 : i32, i32
  }
  func.func @transform_2(%arg0: i32, %arg1: i32, %arg2: i32) -> (i32, i32) {
    %c0_i32 = arith.constant 0 : i32
    %c0_i32_0 = arith.constant 0 : i32
    return %c0_i32, %arg1 : i32, i32
  }
  func.func @transform_3(%arg0: i32, %arg1: i32, %arg2: i32) -> (i32, i32) {
    %c0_i32 = arith.constant 0 : i32
    return %arg0, %arg1 : i32, i32
  }
  func.func @transform_4(%arg0: i32, %arg1: i32, %arg2: i32) -> (i32, i32) {
    %c0_i32 = arith.constant 0 : i32
    return %arg0, %arg1 : i32, i32
  }
}

module attributes {stable_mosaic.version = 11 : i64} {
  func.func @_ln_linear_kernel(%arg0: i32, %arg1: i32, %arg2: memref<16x32xf32, #tpu.memory_space<vmem>>, %arg3: memref<1x32xf32, #tpu.memory_space<vmem>>, %arg4: memref<1x32xf32, #tpu.memory_space<vmem>>, %arg5: memref<32x128xbf16, #tpu.memory_space<vmem>>, %arg6: memref<1x128xf32, #tpu.memory_space<vmem>>, %arg7: memref<16x128xbf16, #tpu.memory_space<vmem>>, %arg8: memref<16x32xbf16, #tpu.memory_space<vmem>>) attributes {dimension_semantics = [#tpu.dimension_semantics<parallel>, #tpu.dimension_semantics<arbitrary>], iteration_bounds = array<i64: 1, 1>, scalar_prefetch = 0 : i64, scratch_operands = 1 : i64, tpu.core_type = #tpu.core_type<tc>, window_params = [{transform_indices = @transform_0, window_bounds = array<i64: 16, 32>}, {pipeline_mode = #tpu.pipeline_mode<synchronous>, transform_indices = @transform_1, window_bounds = array<i64: 1, 32>}, {pipeline_mode = #tpu.pipeline_mode<synchronous>, transform_indices = @transform_2, window_bounds = array<i64: 1, 32>}, {transform_indices = @transform_3, window_bounds = array<i64: 32, 128>}, {transform_indices = @transform_4, window_bounds = array<i64: 1, 128>}, {transform_indices = @transform_5, window_bounds = array<i64: 16, 128>}]} {
    %c0_i32 = arith.constant 0 : i32
    %0 = arith.cmpi eq, %arg1, %c0_i32 : i32
    %1 = arith.extui %0 : i1 to i32
    %c0_i32_0 = arith.constant 0 : i32
    %2 = arith.cmpi ne, %1, %c0_i32_0 : i32
    scf.if %2 {
      %c0_12 = arith.constant 0 : index
      %c0_13 = arith.constant 0 : index
      %24 = vector.load %arg2[%c0_12, %c0_13] : memref<16x32xf32, #tpu.memory_space<vmem>>, vector<16x32xf32>
      %cst_14 = arith.constant dense<0.000000e+00> : vector<16xf32>
      %25 = vector.multi_reduction <add>, %24, %cst_14 [1] : vector<16x32xf32> to vector<16xf32>
      %26 = vector.shape_cast %25 : vector<16xf32> to vector<16x1xf32>
      %cst_15 = arith.constant 3.200000e+01 : f32
      %27 = vector.broadcast %cst_15 : f32 to vector<16x1xf32>
      %28 = arith.divf %26, %27 : vector<16x1xf32>
      %29 = vector.broadcast %28 : vector<16x1xf32> to vector<16x32xf32>
      %30 = arith.subf %24, %29 : vector<16x32xf32>
      %31 = arith.mulf %30, %30 : vector<16x32xf32>
      %cst_16 = arith.constant dense<0.000000e+00> : vector<16xf32>
      %32 = vector.multi_reduction <add>, %31, %cst_16 [1] : vector<16x32xf32> to vector<16xf32>
      %33 = vector.shape_cast %32 : vector<16xf32> to vector<16x1xf32>
      %cst_17 = arith.constant 3.200000e+01 : f32
      %34 = vector.broadcast %cst_17 : f32 to vector<16x1xf32>
      %35 = arith.divf %33, %34 : vector<16x1xf32>
      %36 = vector.broadcast %28 : vector<16x1xf32> to vector<16x32xf32>
      %37 = arith.subf %24, %36 : vector<16x32xf32>
      %cst_18 = arith.constant 9.99999997E-7 : f32
      %38 = vector.broadcast %cst_18 : f32 to vector<16x1xf32>
      %39 = arith.addf %35, %38 : vector<16x1xf32>
      %40 = math.rsqrt %39 : vector<16x1xf32>
      %41 = vector.broadcast %40 : vector<16x1xf32> to vector<16x32xf32>
      %42 = arith.mulf %37, %41 : vector<16x32xf32>
      %c0_19 = arith.constant 0 : index
      %c0_20 = arith.constant 0 : index
      %43 = vector.load %arg3[%c0_19, %c0_20] : memref<1x32xf32, #tpu.memory_space<vmem>>, vector<1x32xf32>
      %44 = vector.broadcast %43 : vector<1x32xf32> to vector<16x32xf32>
      %45 = arith.mulf %42, %44 : vector<16x32xf32>
      %c0_21 = arith.constant 0 : index
      %c0_22 = arith.constant 0 : index
      %46 = vector.load %arg4[%c0_21, %c0_22] : memref<1x32xf32, #tpu.memory_space<vmem>>, vector<1x32xf32>
      %47 = vector.broadcast %46 : vector<1x32xf32> to vector<16x32xf32>
      %48 = arith.addf %45, %47 : vector<16x32xf32>
      %49 = arith.truncf %48 : vector<16x32xf32> to vector<16x32xbf16>
      %c0_23 = arith.constant 0 : index
      %c0_24 = arith.constant 0 : index
      %50 = vector.load %arg8[%c0_23, %c0_24] : memref<16x32xbf16, #tpu.memory_space<vmem>>, vector<16x32xbf16>
      tpu.vector_store %arg8[%c0_23, %c0_24], %49 {strides = array<i32>} : memref<16x32xbf16, #tpu.memory_space<vmem>>, vector<16x32xbf16>,
    } else {
    }
    %c0 = arith.constant 0 : index
    %c0_1 = arith.constant 0 : index
    %3 = vector.load %arg8[%c0, %c0_1] : memref<16x32xbf16, #tpu.memory_space<vmem>>, vector<16x32xbf16>
    %c0_2 = arith.constant 0 : index
    %c0_3 = arith.constant 0 : index
    %4 = vector.load %arg5[%c0_2, %c0_3] : memref<32x128xbf16, #tpu.memory_space<vmem>>, vector<32x128xbf16>
    %cst = arith.constant dense<0.000000e+00> : vector<16x128xf32>
    %5 = tpu.matmul %3, %4, %cst {dimension_numbers = #tpu.dot_dimension_numbers<[1], [0], [0], [1], [0, 0, 1, 1], [], []>} : vector<16x32xbf16>, vector<32x128xbf16>, vector<16x128xf32> -> vector<16x128xf32>
    %c0_4 = arith.constant 0 : index
    %c0_5 = arith.constant 0 : index
    %6 = vector.load %arg6[%c0_4, %c0_5] : memref<1x128xf32, #tpu.memory_space<vmem>>, vector<1x128xf32>
    %7 = vector.broadcast %6 : vector<1x128xf32> to vector<16x128xf32>
    %8 = arith.addf %5, %7 : vector<16x128xf32>
    %9 = arith.mulf %8, %8 : vector<16x128xf32>
    %10 = arith.mulf %8, %9 : vector<16x128xf32>
    %cst_6 = arith.constant 4.471500e-02 : f32
    %11 = vector.broadcast %cst_6 : f32 to vector<16x128xf32>
    %12 = arith.mulf %11, %10 : vector<16x128xf32>
    %13 = arith.addf %8, %12 : vector<16x128xf32>
    %cst_7 = arith.constant 0.797884583 : f32
    %14 = vector.broadcast %cst_7 : f32 to vector<16x128xf32>
    %15 = arith.mulf %14, %13 : vector<16x128xf32>
    %16 = math.tanh %15 : vector<16x128xf32>
    %cst_8 = arith.constant 1.000000e+00 : f32
    %17 = vector.broadcast %cst_8 : f32 to vector<16x128xf32>
    %18 = arith.addf %17, %16 : vector<16x128xf32>
    %cst_9 = arith.constant 5.000000e-01 : f32
    %19 = vector.broadcast %cst_9 : f32 to vector<16x128xf32>
    %20 = arith.mulf %19, %18 : vector<16x128xf32>
    %21 = arith.mulf %8, %20 : vector<16x128xf32>
    %22 = arith.truncf %21 : vector<16x128xf32> to vector<16x128xbf16>
    %c0_10 = arith.constant 0 : index
    %c0_11 = arith.constant 0 : index
    %23 = vector.load %arg7[%c0_10, %c0_11] : memref<16x128xbf16, #tpu.memory_space<vmem>>, vector<16x128xbf16>
    tpu.vector_store %arg7[%c0_10, %c0_11], %22 {strides = array<i32>} : memref<16x128xbf16, #tpu.memory_space<vmem>>, vector<16x128xbf16>,
    return
  }
  func.func @transform_0(%arg0: i32, %arg1: i32) -> (i32, i32) {
    %c0_i32 = arith.constant 0 : i32
    %c0_i32_0 = arith.constant 0 : i32
    return %arg0, %c0_i32 : i32, i32
  }
  func.func @transform_1(%arg0: i32, %arg1: i32) -> (i32, i32) {
    %c0_i32 = arith.constant 0 : i32
    %c0_i32_0 = arith.constant 0 : i32
    %c0_i32_1 = arith.constant 0 : i32
    return %c0_i32, %c0_i32_0 : i32, i32
  }
  func.func @transform_2(%arg0: i32, %arg1: i32) -> (i32, i32) {
    %c0_i32 = arith.constant 0 : i32
    %c0_i32_0 = arith.constant 0 : i32
    %c0_i32_1 = arith.constant 0 : i32
    return %c0_i32, %c0_i32_0 : i32, i32
  }
  func.func @transform_3(%arg0: i32, %arg1: i32) -> (i32, i32) {
    %c0_i32 = arith.constant 0 : i32
    %c0_i32_0 = arith.constant 0 : i32
    return %c0_i32, %arg1 : i32, i32
  }
  func.func @transform_4(%arg0: i32, %arg1: i32) -> (i32, i32) {
    %c0_i32 = arith.constant 0 : i32
    %c0_i32_0 = arith.constant 0 : i32
    return %c0_i32, %arg1 : i32, i32
  }
  func.func @transform_5(%arg0: i32, %arg1: i32) -> (i32, i32) {
    %c0_i32 = arith.constant 0 : i32
    return %arg0, %arg1 : i32, i32
  }
}

module attributes {stable_mosaic.version = 11 : i64} {
  func.func @_ln_linear_kernel(%arg0: i32, %arg1: i32, %arg2: memref<2x32xf32, #tpu.memory_space<vmem>>, %arg3: memref<1x32xf32, #tpu.memory_space<vmem>>, %arg4: memref<1x32xf32, #tpu.memory_space<vmem>>, %arg5: memref<32x32xbf16, #tpu.memory_space<vmem>>, %arg6: memref<1x32xf32, #tpu.memory_space<vmem>>, %arg7: memref<2x32xf32, #tpu.memory_space<vmem>>, %arg8: memref<2x32xbf16, #tpu.memory_space<vmem>>) attributes {dimension_semantics = [#tpu.dimension_semantics<parallel>, #tpu.dimension_semantics<arbitrary>], iteration_bounds = array<i64: 1, 1>, scalar_prefetch = 0 : i64, scratch_operands = 1 : i64, tpu.core_type = #tpu.core_type<tc>, window_params = [{transform_indices = @transform_0, window_bounds = array<i64: 2, 32>}, {pipeline_mode = #tpu.pipeline_mode<synchronous>, transform_indices = @transform_1, window_bounds = array<i64: 1, 32>}, {pipeline_mode = #tpu.pipeline_mode<synchronous>, transform_indices = @transform_2, window_bounds = array<i64: 1, 32>}, {transform_indices = @transform_3, window_bounds = array<i64: 32, 32>}, {transform_indices = @transform_4, window_bounds = array<i64: 1, 32>}, {transform_indices = @transform_5, window_bounds = array<i64: 2, 32>}]} {
    %c0_i32 = arith.constant 0 : i32
    %0 = arith.cmpi eq, %arg1, %c0_i32 : i32
    %1 = arith.extui %0 : i1 to i32
    %c0_i32_0 = arith.constant 0 : i32
    %2 = arith.cmpi ne, %1, %c0_i32_0 : i32
    scf.if %2 {
      %c0_8 = arith.constant 0 : index
      %c0_9 = arith.constant 0 : index
      %11 = vector.load %arg2[%c0_8, %c0_9] : memref<2x32xf32, #tpu.memory_space<vmem>>, vector<2x32xf32>
      %cst_10 = arith.constant dense<0.000000e+00> : vector<2xf32>
      %12 = vector.multi_reduction <add>, %11, %cst_10 [1] : vector<2x32xf32> to vector<2xf32>
      %13 = vector.shape_cast %12 : vector<2xf32> to vector<2x1xf32>
      %cst_11 = arith.constant 3.200000e+01 : f32
      %14 = vector.broadcast %cst_11 : f32 to vector<2x1xf32>
      %15 = arith.divf %13, %14 : vector<2x1xf32>
      %16 = vector.broadcast %15 : vector<2x1xf32> to vector<2x32xf32>
      %17 = arith.subf %11, %16 : vector<2x32xf32>
      %18 = arith.mulf %17, %17 : vector<2x32xf32>
      %cst_12 = arith.constant dense<0.000000e+00> : vector<2xf32>
      %19 = vector.multi_reduction <add>, %18, %cst_12 [1] : vector<2x32xf32> to vector<2xf32>
      %20 = vector.shape_cast %19 : vector<2xf32> to vector<2x1xf32>
      %cst_13 = arith.constant 3.200000e+01 : f32
      %21 = vector.broadcast %cst_13 : f32 to vector<2x1xf32>
      %22 = arith.divf %20, %21 : vector<2x1xf32>
      %23 = vector.broadcast %15 : vector<2x1xf32> to vector<2x32xf32>
      %24 = arith.subf %11, %23 : vector<2x32xf32>
      %cst_14 = arith.constant 9.99999997E-7 : f32
      %25 = vector.broadcast %cst_14 : f32 to vector<2x1xf32>
      %26 = arith.addf %22, %25 : vector<2x1xf32>
      %27 = math.rsqrt %26 : vector<2x1xf32>
      %28 = vector.broadcast %27 : vector<2x1xf32> to vector<2x32xf32>
      %29 = arith.mulf %24, %28 : vector<2x32xf32>
      %c0_15 = arith.constant 0 : index
      %c0_16 = arith.constant 0 : index
      %30 = vector.load %arg3[%c0_15, %c0_16] : memref<1x32xf32, #tpu.memory_space<vmem>>, vector<1x32xf32>
      %31 = vector.broadcast %30 : vector<1x32xf32> to vector<2x32xf32>
      %32 = arith.mulf %29, %31 : vector<2x32xf32>
      %c0_17 = arith.constant 0 : index
      %c0_18 = arith.constant 0 : index
      %33 = vector.load %arg4[%c0_17, %c0_18] : memref<1x32xf32, #tpu.memory_space<vmem>>, vector<1x32xf32>
      %34 = vector.broadcast %33 : vector<1x32xf32> to vector<2x32xf32>
      %35 = arith.addf %32, %34 : vector<2x32xf32>
      %36 = arith.truncf %35 : vector<2x32xf32> to vector<2x32xbf16>
      %c0_19 = arith.constant 0 : index
      %c0_20 = arith.constant 0 : index
      %37 = vector.load %arg8[%c0_19, %c0_20] : memref<2x32xbf16, #tpu.memory_space<vmem>>, vector<2x32xbf16>
      tpu.vector_store %arg8[%c0_19, %c0_20], %36 {strides = array<i32>} : memref<2x32xbf16, #tpu.memory_space<vmem>>, vector<2x32xbf16>,
    } else {
    }
    %c0 = arith.constant 0 : index
    %c0_1 = arith.constant 0 : index
    %3 = vector.load %arg8[%c0, %c0_1] : memref<2x32xbf16, #tpu.memory_space<vmem>>, vector<2x32xbf16>
    %c0_2 = arith.constant 0 : index
    %c0_3 = arith.constant 0 : index
    %4 = vector.load %arg5[%c0_2, %c0_3] : memref<32x32xbf16, #tpu.memory_space<vmem>>, vector<32x32xbf16>
    %cst = arith.constant dense<0.000000e+00> : vector<2x32xf32>
    %5 = tpu.matmul %3, %4, %cst {dimension_numbers = #tpu.dot_dimension_numbers<[1], [0], [0], [1], [0, 0, 1, 1], [], []>} : vector<2x32xbf16>, vector<32x32xbf16>, vector<2x32xf32> -> vector<2x32xf32>
    %c0_4 = arith.constant 0 : index
    %c0_5 = arith.constant 0 : index
    %6 = vector.load %arg6[%c0_4, %c0_5] : memref<1x32xf32, #tpu.memory_space<vmem>>, vector<1x32xf32>
    %7 = vector.broadcast %6 : vector<1x32xf32> to vector<2x32xf32>
    %8 = arith.addf %5, %7 : vector<2x32xf32>
    %9 = math.tanh %8 : vector<2x32xf32>
    %c0_6 = arith.constant 0 : index
    %c0_7 = arith.constant 0 : index
    %10 = vector.load %arg7[%c0_6, %c0_7] : memref<2x32xf32, #tpu.memory_space<vmem>>, vector<2x32xf32>
    tpu.vector_store %arg7[%c0_6, %c0_7], %9 {strides = array<i32>} : memref<2x32xf32, #tpu.memory_space<vmem>>, vector<2x32xf32>,
    return
  }
  func.func @transform_0(%arg0: i32, %arg1: i32) -> (i32, i32) {
    %c0_i32 = arith.constant 0 : i32
    %c0_i32_0 = arith.constant 0 : i32
    return %arg0, %c0_i32 : i32, i32
  }
  func.func @transform_1(%arg0: i32, %arg1: i32) -> (i32, i32) {
    %c0_i32 = arith.constant 0 : i32
    %c0_i32_0 = arith.constant 0 : i32
    %c0_i32_1 = arith.constant 0 : i32
    return %c0_i32, %c0_i32_0 : i32, i32
  }
  func.func @transform_2(%arg0: i32, %arg1: i32) -> (i32, i32) {
    %c0_i32 = arith.constant 0 : i32
    %c0_i32_0 = arith.constant 0 : i32
    %c0_i32_1 = arith.constant 0 : i32
    return %c0_i32, %c0_i32_0 : i32, i32
  }
  func.func @transform_3(%arg0: i32, %arg1: i32) -> (i32, i32) {
    %c0_i32 = arith.constant 0 : i32
    %c0_i32_0 = arith.constant 0 : i32
    return %c0_i32, %arg1 : i32, i32
  }
  func.func @transform_4(%arg0: i32, %arg1: i32) -> (i32, i32) {
    %c0_i32 = arith.constant 0 : i32
    %c0_i32_0 = arith.constant 0 : i32
    return %c0_i32, %arg1 : i32, i32
  }
  func.func @transform_5(%arg0: i32, %arg1: i32) -> (i32, i32) {
    %c0_i32 = arith.constant 0 : i32
    return %arg0, %arg1 : i32, i32
  }
}

</mosaic_0001>

<llo_original>
// kernel: vit_forward_features.12
$region0: #{vit_forward_features.12}
  #allocation0 [shape = 'u32[]', space=smem, size = 0x4, offset = 0x4, fixed_abs, tag = 'smem constant byte address 0x4 - core index']
  #allocation1 [shape = 'u32[72,128]{1,0:T(1,128)}', space=vmem, size = 0x9000, scoped, tag = 'internal scratch']
  #allocation2 [shape = 'f32[8,32]{1,0:T(8,128)}', space=vmem, size = 0x1000, scoped, tag = 'scratch operand']
  %s0 = inlined_call_operand.vmem [shape: f32[8,192], index: 0, kind: input, shape index: {}]
  %s1 = inlined_call_operand.vmem [shape: bf16[192,32], index: 1, kind: input, shape index: {}]
  %s2 = inlined_call_operand.vmem [shape: f32[1,32], index: 2, kind: input, shape index: {}]
  %s3 = inlined_call_operand.vmem [shape: f32[8,32], index: 3, kind: output, shape index: {}]
  %s4 = sld [smem:[#allocation0]]
  $region30: #{vit_forward_features.12} parent=0
    _
  %s6 = ssub.s32 1, %s4
  %s7 = scalar_select 0, %s6, %s4
  // Predicated region
  $region2: #{vit_forward_features.12} parent=0 // pred_check
    _
  $region3: #{vit_forward_features.12} parent=0 // pred_check_branch
    %9 = sbr.rel (0) target = $region5
  $region4: #{vit_forward_features.12} parent=0 // pred_region
    _
  $region5: #{vit_forward_features.12} parent=0 // pred_fallthru
    _
  // Predicated region
  $region6: #{vit_forward_features.12} parent=0 // pred_check
    _
  $region7: #{vit_forward_features.12} parent=0 // pred_check_branch
    %11 = sbr.rel (0) target = $region9
  $region8: #{vit_forward_features.12} parent=0 // pred_region
    _
  $region9: #{vit_forward_features.12} parent=0 // pred_fallthru
    _
  // Predicated region
  $region10: #{vit_forward_features.12} parent=0 // pred_check
    _
  $region11: #{vit_forward_features.12} parent=0 // pred_check_branch
    %13 = sbr.rel (0) target = $region13
  $region12: #{vit_forward_features.12} parent=0 // pred_region
    _
  $region13: #{vit_forward_features.12} parent=0 // pred_fallthru
    _
  %p15 = scmp.eq.s32.totalorder 0, 0
  // Predicated region
  $region14: #{vit_forward_features.12} parent=0 // pred_check
    %p16 = pneg %p15
  $region15: #{vit_forward_features.12} parent=0 // pred_check_branch
    %18 = sbr.rel (%p16) target = $region17
  $region16: #{vit_forward_features.12} parent=0 // pred_region
    %vm19 = vcmask 261120
    %20 = vst.msk [vmem:[#allocation2] sm:$0xff] %vm19, 0.0
  $region17: #{vit_forward_features.12} parent=0 // pred_fallthru
    _
  %v21 = vld [vmem:[#allocation2] sm:$0xff]
  %v22 = vld [vmem:[%s0] sm:$0xff]
  %v23 = vld [vmem:[%s0 + $0x8] sm:$0xff]
  %v24 = vpack.c.bf16 %v22, %v22
  %v25 = vpack.c.bf16 %v23, %v23
  %v26 = vld [vmem:[%s1] sm:$0xf]
  %v27 = vld [vmem:[%s1 + $0x4] sm:$0xf]
  %v28 = vld [vmem:[%s1 + $0x8] sm:$0xf]
  %v29 = vld [vmem:[%s1 + $0xc] sm:$0xf]
  %v30 = vld [vmem:[%s1 + $0x10] sm:$0xf]
  %v31 = vld [vmem:[%s1 + $0x14] sm:$0xf]
  %v32 = vld [vmem:[%s1 + $0x18] sm:$0xf]
  %v33 = vld [vmem:[%s1 + $0x1c] sm:$0xf]
  %v34 = vld [vmem:[%s1 + $0x20] sm:$0xf]
  %v35 = vld [vmem:[%s1 + $0x24] sm:$0xf]
  %v36 = vld [vmem:[%s1 + $0x28] sm:$0xf]
  %v37 = vld [vmem:[%s1 + $0x2c] sm:$0xf]
  %v38 = vld [vmem:[%s1 + $0x30] sm:$0xf]
  %v39 = vld [vmem:[%s1 + $0x34] sm:$0xf]
  %v40 = vld [vmem:[%s1 + $0x38] sm:$0xf]
  %v41 = vld [vmem:[%s1 + $0x3c] sm:$0xf]
  %v42 = vld [vmem:[%s1 + $0x40] sm:$0xf]
  %v43 = vld [vmem:[%s1 + $0x44] sm:$0xf]
  %v44 = vld [vmem:[%s1 + $0x48] sm:$0xf]
  %v45 = vld [vmem:[%s1 + $0x4c] sm:$0xf]
  %v46 = vld [vmem:[%s1 + $0x50] sm:$0xf]
  %v47 = vld [vmem:[%s1 + $0x54] sm:$0xf]
  %v48 = vld [vmem:[%s1 + $0x58] sm:$0xf]
  %v49 = vld [vmem:[%s1 + $0x5c] sm:$0xf]
  %v74 = vunpack.c.l.b16 %v26
  %v75 = vunpack.c.l.b16 %v27
  %v76 = vunpack.c.l.b16 %v28
  %v77 = vunpack.c.l.b16 %v29
  %v78 = vunpack.c.l.b16 %v30
  %v79 = vunpack.c.l.b16 %v31
  %v80 = vunpack.c.l.b16 %v32
  %v81 = vunpack.c.l.b16 %v33
  %v82 = vunpack.c.l.b16 %v34
  %v83 = vunpack.c.l.b16 %v35
  %v84 = vunpack.c.l.b16 %v36
  %v85 = vunpack.c.l.b16 %v37
  %v86 = vunpack.c.l.b16 %v38
  %v87 = vunpack.c.l.b16 %v39
  %v88 = vunpack.c.l.b16 %v40
  %v89 = vunpack.c.l.b16 %v41
  %v90 = vunpack.c.l.b16 %v42
  %v91 = vunpack.c.l.b16 %v43
  %v92 = vunpack.c.l.b16 %v44
  %v93 = vunpack.c.l.b16 %v45
  %v94 = vunpack.c.l.b16 %v46
  %v95 = vunpack.c.l.b16 %v47
  %v96 = vunpack.c.l.b16 %v48
  %v97 = vunpack.c.l.b16 %v49
  %v98 = vpack.c.b16 %v75, %v74
  %v99 = vpack.c.b16 %v77, %v76
  %v100 = vpack.c.b16 %v79, %v78
  %v101 = vpack.c.b16 %v81, %v80
  %v102 = vpack.c.b16 %v83, %v82
  %v103 = vpack.c.b16 %v85, %v84
  %v104 = vpack.c.b16 %v87, %v86
  %v105 = vpack.c.b16 %v89, %v88
  %v106 = vpack.c.b16 %v91, %v90
  %v107 = vpack.c.b16 %v93, %v92
  %v108 = vpack.c.b16 %v95, %v94
  %v109 = vpack.c.b16 %v97, %v96
  %vm122 = vcmask 523264
  %v124 = vsel %vm122, %v25, 0
  %126 = vmatpush.bf16.msra.mxu0 %v105
  %127 = vmatpush.bf16.msra.mxu0 %v104
  %128 = vmatpush.bf16.msra.mxu0 %v103
  %129 = vmatpush.bf16.msra.mxu0 %v102
  %130 = vmatpush.bf16.msra.mxu0 %v101
  %131 = vmatpush.bf16.msra.mxu0 %v100
  %132 = vmatpush.bf16.msra.mxu0 %v99
  %133 = vmatpush.bf16.msra.mxu0 %v98
  %134 = vmatmul.bf16.gmra.mxu0 %v24
  %v135 = vpop.f32.mrf.mxu0
  %v136 = vadd.f32 0.0, %v135
  %v137 = vpop.f32.mrf.mxu0
  %138 = vdwg.mxu0
  %139 = vmatpush.bf16.msra.mxu0 0
  %140 = vmatpush.bf16.msra.mxu0 0
  %141 = vmatpush.bf16.msra.mxu0 0
  %142 = vmatpush.bf16.msra.mxu0 0
  %143 = vmatpush.bf16.msra.mxu0 %v109
  %144 = vmatpush.bf16.msra.mxu0 %v108
  %145 = vmatpush.bf16.msra.mxu0 %v107
  %146 = vmatpush.bf16.msra.mxu0 %v106
  %147 = vmatmul.bf16.gmra.mxu0 %v124
  %v148 = vpop.f32.mrf.mxu0
  %v149 = vadd.f32 %v136, %v148
  %v150 = vpop.f32.mrf.mxu0
  %151 = vdwg.mxu0
  %v152 = vadd.f32 %v21, %v149
  %vm153 = vcmask 261120
  %154 = vst.msk [vmem:[#allocation2] sm:$0xff] %vm153, %v152
  // Predicated region
  $region18: #{vit_forward_features.12} parent=0 // pred_check
    %p155 = pneg %p15
  $region19: #{vit_forward_features.12} parent=0 // pred_check_branch
    %157 = sbr.rel (%p155) target = $region21
  $region20: #{vit_forward_features.12} parent=0 // pred_region
    %v158 = vld [vmem:[#allocation2] sm:$0xff]
    %v159 = vld [vmem:[%s2] sm:$0x1]
    %v161 = vperm.slane %v159, 0
    %v163 = vadd.f32 %v158, %v161
    %164 = vst.msk [vmem:[%s3] sm:$0xff] %vm153, %v163
  $region21: #{vit_forward_features.12} parent=0 // pred_fallthru
    _
  // Predicated region
  $region22: #{vit_forward_features.12} parent=0 // pred_check
    _
  $region23: #{vit_forward_features.12} parent=0 // pred_check_branch
    %166 = sbr.rel (0) target = $region25
  $region24: #{vit_forward_features.12} parent=0 // pred_region
    _
  $region25: #{vit_forward_features.12} parent=0 // pred_fallthru
    _
  // Predicated region
  $region26: #{vit_forward_features.12} parent=0 // pred_check
    _
  $region27: #{vit_forward_features.12} parent=0 // pred_check_branch
    %168 = sbr.rel (0) target = $region29
  $region28: #{vit_forward_features.12} parent=0 // pred_region
    _
  $region29: #{vit_forward_features.12} parent=0 // pred_fallthru
    _

// kernel: vit_forward_features.13
$region0: #{vit_forward_features.13}
  #allocation0 [shape = 'u32[]', space=smem, size = 0x4, offset = 0x4, fixed_abs, tag = 'smem constant byte address 0x4 - core index']
  #allocation1 [shape = 'u32[72,128]{1,0:T(1,128)}', space=vmem, size = 0x9000, scoped, tag = 'internal scratch']
  #allocation2 [shape = 'bf16[16,32]{1,0:T(8,128)(2,1)}', space=vmem, size = 0x1000, scoped, tag = 'scratch operand']
  %s0 = inlined_call_operand.vmem [shape: f32[16,32], index: 0, kind: input, shape index: {}]
  %s1 = inlined_call_operand.vmem [shape: f32[1,32], index: 1, kind: input, shape index: {}]
  %s2 = inlined_call_operand.vmem [shape: f32[1,32], index: 2, kind: input, shape index: {}]
  %s3 = inlined_call_operand.vmem [shape: bf16[32,96], index: 3, kind: input, shape index: {}]
  %s4 = inlined_call_operand.vmem [shape: f32[1,96], index: 4, kind: input, shape index: {}]
  %s5 = inlined_call_operand.vmem [shape: bf16[16,96], index: 5, kind: output, shape index: {}]
  %s6 = sld [smem:[#allocation0]]
  $region34: #{vit_forward_features.13} parent=0
    _
  %s8 = ssub.s32 1, %s6
  %s9 = scalar_select 0, %s8, %s6
  // Predicated region
  $region2: #{vit_forward_features.13} parent=0 // pred_check
    _
  $region3: #{vit_forward_features.13} parent=0 // pred_check_branch
    %11 = sbr.rel (0) target = $region5
  $region4: #{vit_forward_features.13} parent=0 // pred_region
    _
  $region5: #{vit_forward_features.13} parent=0 // pred_fallthru
    _
  // Predicated region
  $region6: #{vit_forward_features.13} parent=0 // pred_check
    _
  $region7: #{vit_forward_features.13} parent=0 // pred_check_branch
    %13 = sbr.rel (0) target = $region9
  $region8: #{vit_forward_features.13} parent=0 // pred_region
    _
  $region9: #{vit_forward_features.13} parent=0 // pred_fallthru
    _
  // Predicated region
  $region10: #{vit_forward_features.13} parent=0 // pred_check
    _
  $region11: #{vit_forward_features.13} parent=0 // pred_check_branch
    %15 = sbr.rel (0) target = $region13
  $region12: #{vit_forward_features.13} parent=0 // pred_region
    _
  $region13: #{vit_forward_features.13} parent=0 // pred_fallthru
    _
  // Predicated region
  $region14: #{vit_forward_features.13} parent=0 // pred_check
    _
  $region15: #{vit_forward_features.13} parent=0 // pred_check_branch
    %17 = sbr.rel (0) target = $region17
  $region16: #{vit_forward_features.13} parent=0 // pred_region
    _
  $region17: #{vit_forward_features.13} parent=0 // pred_fallthru
    _
  // Predicated region
  $region18: #{vit_forward_features.13} parent=0 // pred_check
    _
  $region19: #{vit_forward_features.13} parent=0 // pred_check_branch
    %19 = sbr.rel (0) target = $region21
  $region20: #{vit_forward_features.13} parent=0 // pred_region
    _
  $region21: #{vit_forward_features.13} parent=0 // pred_fallthru
    _
  %p21 = scmp.eq.s32.totalorder 0, 0
  // Predicated region
  $region22: #{vit_forward_features.13} parent=0 // pred_check
    %p22 = pneg %p21
  $region23: #{vit_forward_features.13} parent=0 // pred_check_branch
    %24 = sbr.rel (%p22) target = $region25
  $region24: #{vit_forward_features.13} parent=0 // pred_region
    %v25 = vld [vmem:[%s0] sm:$0xff]
    %v26 = vld [vmem:[%s0 + $0x8] sm:$0xff]
    %vm27 = vcmask 261120
    %v28 = vsel %vm27, %v25, 0.0
    %29 = vadd.xlane.f32.xlu0 %v28
    %v30 = vpop.xlane.xlu0 %29
    %v31 = vsel %vm27, %v26, 0.0
    %32 = vadd.xlane.f32.xlu0 %v31
    %v33 = vpop.xlane.xlu0 %32
    %v34 = vrcp.pop 32.0
    %v35 = vmul.f32 32.0, %v34
    %v36 = vsub.f32 1.0, %v35
    %v37 = vmul.f32 %v34, %v36
    %v38 = vadd.f32 %v34, %v37
    %vm39 = vweird.f32 %v34
    %v40 = vsel %vm39, %v34, %v38
    %v41 = vmul.f32 %v30, %v40
    %v42 = vmul.f32 %v33, %v40
    %v43 = vsub.f32 %v25, %v41
    %v44 = vsub.f32 %v26, %v42
    %v45 = vmul.f32 %v43, %v43
    %v46 = vmul.f32 %v44, %v44
    %v47 = vsel %vm27, %v45, 0.0
    %48 = vadd.xlane.f32.xlu0 %v47
    %v49 = vpop.xlane.xlu0 %48
    %v50 = vsel %vm27, %v46, 0.0
    %51 = vadd.xlane.f32.xlu0 %v50
    %v52 = vpop.xlane.xlu0 %51
    %v53 = vmul.f32 %v49, %v40
    %v54 = vmul.f32 %v52, %v40
    %v55 = vadd.f32 %v53, 1e-06
    %v56 = vadd.f32 %v54, 1e-06
    %v57 = vrsqrt.pop %v55
    %v58 = vmul.f32 %v57, %v55
    %v59 = vmul.f32 %v58, %v57
    %v60 = vmul.f32 0.5, %v59
    %v61 = vsub.f32 1.5, %v60
    %v62 = vmul.f32 %v57, %v61
    %vm63 = vweird.f32 %v55
    %vm64 = vweird.f32 %v57
    %vm65 = vmor %vm63, %vm64
    %v66 = vsel %vm65, %v57, %v62
    %v67 = vrsqrt.pop %v56
    %v68 = vmul.f32 %v67, %v56
    %v69 = vmul.f32 %v68, %v67
    %v70 = vmul.f32 0.5, %v69
    %v71 = vsub.f32 1.5, %v70
    %v72 = vmul.f32 %v67, %v71
    %vm73 = vweird.f32 %v56
    %vm74 = vweird.f32 %v67
    %vm75 = vmor %vm73, %vm74
    %v76 = vsel %vm75, %v67, %v72
    %v77 = vmul.f32 %v43, %v66
    %v78 = vmul.f32 %v44, %v76
    %v79 = vld [vmem:[%s1] sm:$0x1]
    %v81 = vperm.slane %v79, 0
    %v83 = vmul.f32 %v77, %v81
    %v84 = vmul.f32 %v78, %v81
    %v85 = vld [vmem:[%s2] sm:$0x1]
    %v87 = vperm.slane %v85, 0
    %v89 = vadd.f32 %v83, %v87
    %v90 = vadd.f32 %v84, %v87
    %v91 = vpack.c.bf16 %v89, %v89
    %v92 = vpack.c.bf16 %v90, %v90
    %vm93 = vcmask 257024
    %94 = vst.msk [vmem:[#allocation2] sm:$0xf] %vm93, %v91
    %95 = vst.msk [vmem:[#allocation2 + $0x4] sm:$0xf] %vm93, %v92
  $region25: #{vit_forward_features.13} parent=0 // pred_fallthru
    _
  %v96 = vld [vmem:[#allocation2] sm:$0xf]
  %v97 = vld [vmem:[#allocation2 + $0x4] sm:$0xf]
  %v98 = vld [vmem:[%s3] sm:$0xf]
  %v99 = vld [vmem:[%s3 + $0x4] sm:$0xf]
  %v100 = vld [vmem:[%s3 + $0x8] sm:$0xf]
  %v101 = vld [vmem:[%s3 + $0xc] sm:$0xf]
  %v102 = vld [vmem:[%s4] sm:$0x1]
  %v104 = vperm.slane %v102, 0
  %v108 = vunpack.c.l.b16 %v96
  %v109 = vunpack.c.l.b16 %v97
  %v110 = vpack.c.b16 %v109, %v108
  %v115 = vunpack.c.l.b16 %v98
  %v116 = vunpack.c.l.b16 %v99
  %v117 = vunpack.c.l.b16 %v100
  %v118 = vunpack.c.l.b16 %v101
  %v119 = vpack.c.b16 %v116, %v115
  %v120 = vpack.c.b16 %v118, %v117
  %vm123 = vcmask 261120
  %v125 = vsel %vm123, %v110, 0
  %127 = vmatpush.bf16.msra.mxu0 0
  %128 = vmatpush.bf16.msra.mxu0 0
  %129 = vmatpush.bf16.msra.mxu0 0
  %130 = vmatpush.bf16.msra.mxu0 0
  %131 = vmatpush.bf16.msra.mxu0 0
  %132 = vmatpush.bf16.msra.mxu0 0
  %133 = vmatpush.bf16.msra.mxu0 %v120
  %134 = vmatpush.bf16.msra.mxu0 %v119
  %135 = vmatmul.bf16.gmra.mxu0 %v125
  %v136 = vpop.f32.mrf.mxu0
  %v137 = vadd.f32 %v104, %v136
  %v138 = vpop.f32.mrf.mxu0
  %v139 = vadd.f32 %v104, %v138
  %140 = vdwg.mxu0
  %v141 = vpack.c.bf16 %v137, %v137
  %v142 = vpack.c.bf16 %v139, %v139
  %vm143 = vcmask 781312
  %144 = vst.msk [vmem:[%s5] sm:$0xf] %vm143, %v141
  %145 = vst.msk [vmem:[%s5 + $0x4] sm:$0xf] %vm143, %v142
  // Predicated region
  $region26: #{vit_forward_features.13} parent=0 // pred_check
    _
  $region27: #{vit_forward_features.13} parent=0 // pred_check_branch
    %147 = sbr.rel (0) target = $region29
  $region28: #{vit_forward_features.13} parent=0 // pred_region
    _
  $region29: #{vit_forward_features.13} parent=0 // pred_fallthru
    _
  // Predicated region
  $region30: #{vit_forward_features.13} parent=0 // pred_check
    _
  $region31: #{vit_forward_features.13} parent=0 // pred_check_branch
    %149 = sbr.rel (0) target = $region33
  $region32: #{vit_forward_features.13} parent=0 // pred_region
    _
  $region33: #{vit_forward_features.13} parent=0 // pred_fallthru
    _

// kernel: vit_forward_features.14
$region0: #{vit_forward_features.14}
  #allocation0 [shape = 'u32[]', space=smem, size = 0x4, offset = 0x4, fixed_abs, tag = 'smem constant byte address 0x4 - core index']
  #allocation1 [shape = 'u32[72,128]{1,0:T(1,128)}', space=vmem, size = 0x9000, scoped, tag = 'internal scratch']
  %s0 = inlined_call_operand.vmem [shape: bf16[2,8,96], index: 0, kind: input, shape index: {}]
  %s1 = inlined_call_operand.vmem [shape: bf16[2,8,32], index: 1, kind: output, shape index: {}]
  %s2 = sld [smem:[#allocation0]]
  $region37: #{vit_forward_features.14} parent=0
    _
  %s4 = ssub.s32 1, %s2
  %s5 = scalar_select 0, %s4, %s2
  loop: start=0, step=1, limit=4
  $region2: #{vit_forward_features.14} parent=0 // loop_pre_header
    _
  $region3: #{vit_forward_features.14} parent=0 // loop_header
    %s7 = sphi 0, %s11
    %p8 = scmp.ge.s32.totalorder %s7, 4
    %s14 = sphi 0, %s26
    %s15 = sphi 0, %s22
    %s16 = sphi 0, %s14
    %s17 = sphi 0, %s15
    %s18 = sphi 0, %s16
    %s19 = sphi 0, %s17
    %s29 = sphi 0, %s31
    %s32 = sphi 0, %s29
    %s33 = sphi 0, %s32
    %s49 = sphi 0, %s33
    %s57 = sphi 0, %s59
    %s60 = sphi 0, %s57
    %s61 = sphi 0, %s60
    %s77 = sphi 0, %s61
  $region4: #{vit_forward_features.14} parent=0 // loop_header_branch
    %10 = sbr.rel (%p8) target = $region8
  $region5: #{vit_forward_features.14} parent=0 // loop_body
    %s12 = ssub.s32 %s7, 1
    %s13 = ssub.s32 %s7, 2
    %s20 = sadd.s32 1, %s15
    %p21 = scmp.ge.s32.totalorder %s20, 1
    %s22 = scalar_select %p21, 0, %s20
    %s23 = sadd.s32 1, %s14
    %s24 = scalar_select %p21, %s23, %s14
    %p25 = scmp.ge.s32.totalorder %s24, 2
    %s26 = scalar_select %p25, 0, %s24
    %s27 = ssub.s32 %s14, %s26
    %p28 = scmp.eq.s32.totalorder %s27, 0
    %s30 = sadd.s32 %s29, 1
    %s31 = scalar_select %p28, %s29, %s30
    %p34 = pneg %p28
    %p35 = scmp.eq.s32.totalorder %s7, 1
    %p36 = por %p34, %p35
    %p37 = scmp.ne.s32.totalorder %s29, %s32
    %p38 = scmp.eq.s32.totalorder %s7, 0
    %p39 = por %p37, %p38
    %p40 = scmp.ne.s32.totalorder %s29, %s32
    %p41 = scmp.eq.s32.totalorder %s12, 1
    %p42 = por %p40, %p41
    %p43 = scmp.ne.s32.totalorder %s32, %s33
    %p44 = scmp.eq.s32.totalorder %s12, 0
    %p45 = por %p43, %p44
    %p46 = scmp.ne.s32.totalorder %s32, %s33
    %p47 = scmp.eq.s32.totalorder %s13, 1
    %p48 = por %p46, %p47
    %p50 = scmp.ne.s32.totalorder %s33, %s49
    %p51 = scmp.eq.s32.totalorder %s13, 0
    %p52 = por %p50, %p51
    %s53 = ssub.s32 %s14, %s26
    %s54 = ssub.s32 %s15, %s22
    %s55 = sor.u32 %s53, %s54
    %p56 = scmp.eq.s32.totalorder %s55, 0
    %s58 = sadd.s32 %s57, 1
    %s59 = scalar_select %p56, %s57, %s58
    %p62 = pneg %p56
    %p63 = scmp.eq.s32.totalorder %s7, 1
    %p64 = por %p62, %p63
    %p65 = scmp.ne.s32.totalorder %s57, %s60
    %p66 = scmp.eq.s32.totalorder %s7, 0
    %p67 = por %p65, %p66
    %p68 = scmp.ne.s32.totalorder %s57, %s60
    %p69 = scmp.eq.s32.totalorder %s12, 1
    %p70 = por %p68, %p69
    %p71 = scmp.ne.s32.totalorder %s60, %s61
    %p72 = scmp.eq.s32.totalorder %s12, 0
    %p73 = por %p71, %p72
    %p74 = scmp.ne.s32.totalorder %s60, %s61
    %p75 = scmp.eq.s32.totalorder %s13, 1
    %p76 = por %p74, %p75
    %p78 = scmp.ne.s32.totalorder %s61, %s77
    %p79 = scmp.eq.s32.totalorder %s13, 0
    %p80 = por %p78, %p79
    %p81 = scmp.le.s32.totalorder 1, %s7
    %p82 = scmp.lt.s32.totalorder %s7, 3
    %p83 = pnand %p81, %p82
    %p84 = pneg %p83
    // Predicated region
    $region9: #{vit_forward_features.14} parent=5 // pred_check
      _
    $region10: #{vit_forward_features.14} parent=5 // pred_check_branch
      %86 = sbr.rel (%p83) target = $region12
    $region11: #{vit_forward_features.14} parent=5 // pred_region
      %s87 = ssub.s32 %s7, 1
    $region12: #{vit_forward_features.14} parent=5 // pred_fallthru
      _
    %p88 = scmp.lt.s32.totalorder %s7, 2
    // Predicated region
    $region13: #{vit_forward_features.14} parent=5 // pred_check
      %p89 = pneg %p88
    $region14: #{vit_forward_features.14} parent=5 // pred_check_branch
      %91 = sbr.rel (%p89) target = $region16
    $region15: #{vit_forward_features.14} parent=5 // pred_region
      // Predicated region
      $region17: #{vit_forward_features.14} parent=15 // pred_check
        %p92 = pneg %p39
      $region18: #{vit_forward_features.14} parent=15 // pred_check_branch
        %94 = sbr.rel (%p92) target = $region20
      $region19: #{vit_forward_features.14} parent=15 // pred_region
        %p95 = scmp.lt.s32.totalorder %s14, 1
        %s96 = scalar_select %p95, %s14, 1
        %s97 = smul.addr %s96, 4
        %s98 = scalar_lea.vmem %s0, %s97
      $region20: #{vit_forward_features.14} parent=15 // pred_fallthru
        _
    $region16: #{vit_forward_features.14} parent=5 // pred_fallthru
      _
    %p99 = scmp.le.s32.totalorder 1, %s7
    %p100 = scmp.lt.s32.totalorder %s7, 3
    %p101 = pnand %p99, %p100
    %p102 = pneg %p101
    // Predicated region
    $region21: #{vit_forward_features.14} parent=5 // pred_check
      _
    $region22: #{vit_forward_features.14} parent=5 // pred_check_branch
      %104 = sbr.rel (%p101) target = $region24
    $region23: #{vit_forward_features.14} parent=5 // pred_region
      %s105 = ssub.s32 %s7, 1
      %p106 = scmp.lt.s32.totalorder %s16, 1
      %s107 = scalar_select %p106, %s16, 1
      %s108 = smul.addr %s107, 4
      %s109 = scalar_lea.vmem %s0, %s108
      %p110 = pneg %p45
      %p111 = pneg %p42
      %p112 = pneg %p73
      %p113 = pneg %p70
      %p114 = scmp.lt.s32.totalorder %s16, 1
      %s115 = scalar_select %p114, %s16, 1
      %p116 = scmp.lt.s32.totalorder %s17, 0
      %s117 = scalar_select %p116, %s17, 0
      %s118 = sadd.s32 %s117, %s115
      %s119 = smul.addr %s118, 4
      %s120 = scalar_lea.vmem %s1, %s119
      %p121 = scmp.lt.s32.totalorder %s16, 1
      %s122 = scalar_select %p121, %s16, 1
      %s123 = smul.addr %s122, 4
      %s124 = scalar_lea.vmem %s0, %s123
      %p125 = scmp.lt.s32.totalorder %s16, 1
      %s126 = scalar_select %p125, %s16, 1
      %p127 = scmp.lt.s32.totalorder %s17, 0
      %s128 = scalar_select %p127, %s17, 0
      %s129 = sadd.s32 %s128, %s126
      %s130 = smul.addr %s129, 4
      %s131 = scalar_lea.vmem %s1, %s130
      %v133 = vld [vmem:[%s124] sm:$0xf]
      %v134 = vlaneseq
      %v135 = vand.u32 %v134, 127
      %vm136 = vcmp.lt.s32.totalorder %v135, 5
      %v138 = vunpack.c.l.b16 %v133
      %v139 = vpack.c.b16 %v138, %v138
      %140 = vrot.lane.b32.xlu0 %v139, 96
      %v141 = vpop.permute.xlu0 %140
      %vm142 = vcmask 64512
      %v144 = vsel %vm142, %v133, 0
      %v147 = vsel %vm142, %v141, 0
      %149 = vmatpush.bf16.xpose.msra.mxu0 0
      %150 = vmatpush.bf16.xpose.msra.mxu0 0
      %151 = vmatpush.bf16.xpose.msra.mxu0 0
      %152 = vmatpush.bf16.xpose.msra.mxu0 0
      %153 = vmatpush.bf16.xpose.msra.mxu0 0
      %154 = vmatpush.bf16.xpose.msra.mxu0 0
      %155 = vmatpush.bf16.xpose.msra.mxu0 0
      %156 = vmatpush.bf16.xpose.msra.mxu0 %v147
      %157 = vmatmul.bf16.gmra.mxu0 %v144
      %v158 = vpop.f32.mrf.mxu0
      %v159 = vadd.f32 0.0, %v158
      %v160 = vpop.f32.mrf.mxu0
      %161 = vdwg.mxu0
      %v162 = vmul.f32 %v159, 0.35355338
      %v163 = vsel %vm136, %v162, -1e+30
      %v164 = vsel %vm142, %v163, -inf
      %165 = vmax.xlane.f32.xlu0 %v164
      %v166 = vpop.xlane.xlu0 %165
      %v167 = vsub.f32 %v163, %v166
      %v168 = vmul.f32 %v167, 1.442695
      %v169 = vpow.pop %v168
      %v170 = vsel %vm142, %v169, 0.0
      %171 = vadd.xlane.f32.xlu0 %v170
      %v172 = vpop.xlane.xlu0 %171
      %v173 = vrcp.pop %v172
      %v174 = vmul.f32 %v172, %v173
      %v175 = vsub.f32 1.0, %v174
      %v176 = vmul.f32 %v173, %v175
      %v177 = vadd.f32 %v173, %v176
      %vm178 = vweird.f32 %v172
      %vm179 = vweird.f32 %v173
      %vm180 = vmor %vm178, %vm179
      %v181 = vsel %vm180, %v173, %v177
      %v182 = vand.u32 2147483647, %v172
      %vm183 = vcmp.eq.f32.partialorder %v182, 8.507059e+37
      %v184 = vand.u32 %v172, 2147483648
      %v185 = vor.u32 1.1754944e-38, %v184
      %v186 = vsel %vm183, %v185, %v181
      %v187 = vmul.f32 %v169, %v186
      %v188 = vpack.c.bf16 %v187, %v187
      %189 = vrot.lane.b32.xlu0 %v139, 64
      %v190 = vpop.permute.xlu0 %189
      %v192 = vsel %vm142, %v188, 0
      %vm194 = vcmask 1043456
      %v196 = vsel %vm194, %v190, 0
      %198 = vmatpush.bf16.msra.mxu0 0
      %199 = vmatpush.bf16.msra.mxu0 0
      %200 = vmatpush.bf16.msra.mxu0 0
      %201 = vmatpush.bf16.msra.mxu0 0
      %202 = vmatpush.bf16.msra.mxu0 0
      %203 = vmatpush.bf16.msra.mxu0 0
      %204 = vmatpush.bf16.msra.mxu0 0
      %205 = vmatpush.bf16.msra.mxu0 %v196
      %206 = vmatmul.bf16.gmra.mxu0 %v192
      %v207 = vpop.f32.mrf.mxu0
      %v208 = vadd.f32 0.0, %v207
      %v209 = vpop.f32.mrf.mxu0
      %210 = vdwg.mxu0
      %v211 = vpack.c.bf16 %v208, %v208
      %vm212 = vcmask 60416
      %213 = vst.msk [vmem:[%s131] sm:$0xf] %vm212, %v211
      %214 = vrot.lane.b32.xlu0 %v139, 120
      %v215 = vpop.permute.xlu0 %214
      %216 = vrot.lane.b32.xlu0 %v139, 88
      %v217 = vpop.permute.xlu0 %216
      %v219 = vsel %vm142, %v215, 0
      %v222 = vsel %vm142, %v217, 0
      %224 = vmatpush.bf16.xpose.msra.mxu0 0
      %225 = vmatpush.bf16.xpose.msra.mxu0 0
      %226 = vmatpush.bf16.xpose.msra.mxu0 0
      %227 = vmatpush.bf16.xpose.msra.mxu0 0
      %228 = vmatpush.bf16.xpose.msra.mxu0 0
      %229 = vmatpush.bf16.xpose.msra.mxu0 0
      %230 = vmatpush.bf16.xpose.msra.mxu0 0
      %231 = vmatpush.bf16.xpose.msra.mxu0 %v222
      %232 = vmatmul.bf16.gmra.mxu0 %v219
      %v233 = vpop.f32.mrf.mxu0
      %v234 = vadd.f32 0.0, %v233
      %v235 = vpop.f32.mrf.mxu0
      %236 = vdwg.mxu0
      %v237 = vmul.f32 %v234, 0.35355338
      %v238 = vsel %vm136, %v237, -1e+30
      %v239 = vsel %vm142, %v238, -inf
      %240 = vmax.xlane.f32.xlu0 %v239
      %v241 = vpop.xlane.xlu0 %240
      %v242 = vsub.f32 %v238, %v241
      %v243 = vmul.f32 %v242, 1.442695
      %v244 = vpow.pop %v243
      %v245 = vsel %vm142, %v244, 0.0
      %246 = vadd.xlane.f32.xlu0 %v245
      %v247 = vpop.xlane.xlu0 %246
      %v248 = vrcp.pop %v247
      %v249 = vmul.f32 %v247, %v248
      %v250 = vsub.f32 1.0, %v249
      %v251 = vmul.f32 %v248, %v250
      %v252 = vadd.f32 %v248, %v251
      %vm253 = vweird.f32 %v247
      %vm254 = vweird.f32 %v248
      %vm255 = vmor %vm253, %vm254
      %v256 = vsel %vm255, %v248, %v252
      %v257 = vand.u32 2147483647, %v247
      %vm258 = vcmp.eq.f32.partialorder %v257, 8.507059e+37
      %v259 = vand.u32 %v247, 2147483648
      %v260 = vor.u32 1.1754944e-38, %v259
      %v261 = vsel %vm258, %v260, %v256
      %v262 = vmul.f32 %v244, %v261
      %v263 = vpack.c.bf16 %v262, %v262
      %264 = vrot.lane.b32.xlu0 %v139, 56
      %v265 = vpop.permute.xlu0 %264
      %v267 = vsel %vm142, %v263, 0
      %v270 = vsel %vm194, %v265, 0
      %272 = vmatpush.bf16.msra.mxu0 0
      %273 = vmatpush.bf16.msra.mxu0 0
      %274 = vmatpush.bf16.msra.mxu0 0
      %275 = vmatpush.bf16.msra.mxu0 0
      %276 = vmatpush.bf16.msra.mxu0 0
      %277 = vmatpush.bf16.msra.mxu0 0
      %278 = vmatpush.bf16.msra.mxu0 0
      %279 = vmatpush.bf16.msra.mxu0 %v270
      %280 = vmatmul.bf16.gmra.mxu0 %v267
      %v281 = vpop.f32.mrf.mxu0
      %v282 = vadd.f32 0.0, %v281
      %v283 = vpop.f32.mrf.mxu0
      %284 = vdwg.mxu0
      %v285 = vpack.c.bf16 %v282, %v282
      %287 = vrot.lane.b32.xlu0 %v285, 8
      %v288 = vpop.permute.xlu0 %287
      %vm290 = vcmask 126016
      %291 = vst.msk [vmem:[%s131] sm:$0xf] %vm290, %v288
      %292 = vrot.lane.b32.xlu0 %v139, 112
      %v293 = vpop.permute.xlu0 %292
      %294 = vrot.lane.b32.xlu0 %v139, 80
      %v295 = vpop.permute.xlu0 %294
      %v297 = vsel %vm142, %v293, 0
      %v300 = vsel %vm142, %v295, 0
      %302 = vmatpush.bf16.xpose.msra.mxu0 0
      %303 = vmatpush.bf16.xpose.msra.mxu0 0
      %304 = vmatpush.bf16.xpose.msra.mxu0 0
      %305 = vmatpush.bf16.xpose.msra.mxu0 0
      %306 = vmatpush.bf16.xpose.msra.mxu0 0
      %307 = vmatpush.bf16.xpose.msra.mxu0 0
      %308 = vmatpush.bf16.xpose.msra.mxu0 0
      %309 = vmatpush.bf16.xpose.msra.mxu0 %v300
      %310 = vmatmul.bf16.gmra.mxu0 %v297
      %v311 = vpop.f32.mrf.mxu0
      %v312 = vadd.f32 0.0, %v311
      %v313 = vpop.f32.mrf.mxu0
      %314 = vdwg.mxu0
      %v315 = vmul.f32 %v312, 0.35355338
      %v316 = vsel %vm136, %v315, -1e+30
      %v317 = vsel %vm142, %v316, -inf
      %318 = vmax.xlane.f32.xlu0 %v317
      %v319 = vpop.xlane.xlu0 %318
      %v320 = vsub.f32 %v316, %v319
      %v321 = vmul.f32 %v320, 1.442695
      %v322 = vpow.pop %v321
      %v323 = vsel %vm142, %v322, 0.0
      %324 = vadd.xlane.f32.xlu0 %v323
      %v325 = vpop.xlane.xlu0 %324
      %v326 = vrcp.pop %v325
      %v327 = vmul.f32 %v325, %v326
      %v328 = vsub.f32 1.0, %v327
      %v329 = vmul.f32 %v326, %v328
      %v330 = vadd.f32 %v326, %v329
      %vm331 = vweird.f32 %v325
      %vm332 = vweird.f32 %v326
      %vm333 = vmor %vm331, %vm332
      %v334 = vsel %vm333, %v326, %v330
      %v335 = vand.u32 2147483647, %v325
      %vm336 = vcmp.eq.f32.partialorder %v335, 8.507059e+37
      %v337 = vand.u32 %v325, 2147483648
      %v338 = vor.u32 1.1754944e-38, %v337
      %v339 = vsel %vm336, %v338, %v334
      %v340 = vmul.f32 %v322, %v339
      %v341 = vpack.c.bf16 %v340, %v340
      %342 = vrot.lane.b32.xlu0 %v139, 48
      %v343 = vpop.permute.xlu0 %342
      %v345 = vsel %vm142, %v341, 0
      %v348 = vsel %vm194, %v343, 0
      %350 = vmatpush.bf16.msra.mxu0 0
      %351 = vmatpush.bf16.msra.mxu0 0
      %352 = vmatpush.bf16.msra.mxu0 0
      %353 = vmatpush.bf16.msra.mxu0 0
      %354 = vmatpush.bf16.msra.mxu0 0
      %355 = vmatpush.bf16.msra.mxu0 0
      %356 = vmatpush.bf16.msra.mxu0 0
      %357 = vmatpush.bf16.msra.mxu0 %v348
      %358 = vmatmul.bf16.gmra.mxu0 %v345
      %v359 = vpop.f32.mrf.mxu0
      %v360 = vadd.f32 0.0, %v359
      %v361 = vpop.f32.mrf.mxu0
      %362 = vdwg.mxu0
      %v363 = vpack.c.bf16 %v360, %v360
      %365 = vrot.lane.b32.xlu0 %v363, 16
      %v366 = vpop.permute.xlu0 %365
      %vm368 = vcmask 191616
      %369 = vst.msk [vmem:[%s131] sm:$0xf] %vm368, %v366
      %370 = vrot.lane.b32.xlu0 %v139, 104
      %v371 = vpop.permute.xlu0 %370
      %372 = vrot.lane.b32.xlu0 %v139, 72
      %v373 = vpop.permute.xlu0 %372
      %v375 = vsel %vm142, %v371, 0
      %v378 = vsel %vm142, %v373, 0
      %380 = vmatpush.bf16.xpose.msra.mxu0 0
      %381 = vmatpush.bf16.xpose.msra.mxu0 0
      %382 = vmatpush.bf16.xpose.msra.mxu0 0
      %383 = vmatpush.bf16.xpose.msra.mxu0 0
      %384 = vmatpush.bf16.xpose.msra.mxu0 0
      %385 = vmatpush.bf16.xpose.msra.mxu0 0
      %386 = vmatpush.bf16.xpose.msra.mxu0 0
      %387 = vmatpush.bf16.xpose.msra.mxu0 %v378
      %388 = vmatmul.bf16.gmra.mxu0 %v375
      %v389 = vpop.f32.mrf.mxu0
      %v390 = vadd.f32 0.0, %v389
      %v391 = vpop.f32.mrf.mxu0
      %392 = vdwg.mxu0
      %v393 = vmul.f32 %v390, 0.35355338
      %v394 = vsel %vm136, %v393, -1e+30
      %v395 = vsel %vm142, %v394, -inf
      %396 = vmax.xlane.f32.xlu0 %v395
      %v397 = vpop.xlane.xlu0 %396
      %v398 = vsub.f32 %v394, %v397
      %v399 = vmul.f32 %v398, 1.442695
      %v400 = vpow.pop %v399
      %v401 = vsel %vm142, %v400, 0.0
      %402 = vadd.xlane.f32.xlu0 %v401
      %v403 = vpop.xlane.xlu0 %402
      %v404 = vrcp.pop %v403
      %v405 = vmul.f32 %v403, %v404
      %v406 = vsub.f32 1.0, %v405
      %v407 = vmul.f32 %v404, %v406
      %v408 = vadd.f32 %v404, %v407
      %vm409 = vweird.f32 %v403
      %vm410 = vweird.f32 %v404
      %vm411 = vmor %vm409, %vm410
      %v412 = vsel %vm411, %v404, %v408
      %v413 = vand.u32 2147483647, %v403
      %vm414 = vcmp.eq.f32.partialorder %v413, 8.507059e+37
      %v415 = vand.u32 %v403, 2147483648
      %v416 = vor.u32 1.1754944e-38, %v415
      %v417 = vsel %vm414, %v416, %v412
      %v418 = vmul.f32 %v400, %v417
      %v419 = vpack.c.bf16 %v418, %v418
      %420 = vrot.lane.b32.xlu0 %v139, 40
      %v421 = vpop.permute.xlu0 %420
      %v423 = vsel %vm142, %v419, 0
      %v426 = vsel %vm194, %v421, 0
      %428 = vmatpush.bf16.msra.mxu0 0
      %429 = vmatpush.bf16.msra.mxu0 0
      %430 = vmatpush.bf16.msra.mxu0 0
      %431 = vmatpush.bf16.msra.mxu0 0
      %432 = vmatpush.bf16.msra.mxu0 0
      %433 = vmatpush.bf16.msra.mxu0 0
      %434 = vmatpush.bf16.msra.mxu0 0
      %435 = vmatpush.bf16.msra.mxu0 %v426
      %436 = vmatmul.bf16.gmra.mxu0 %v423
      %v437 = vpop.f32.mrf.mxu0
      %v438 = vadd.f32 0.0, %v437
      %v439 = vpop.f32.mrf.mxu0
      %440 = vdwg.mxu0
      %v441 = vpack.c.bf16 %v438, %v438
      %443 = vrot.lane.b32.xlu0 %v441, 24
      %v444 = vpop.permute.xlu0 %443
      %vm446 = vcmask 257216
      %447 = vst.msk [vmem:[%s131] sm:$0xf] %vm446, %v444
      %p448 = scmp.lt.s32.totalorder %s16, 1
      %s449 = scalar_select %p448, %s16, 1
      %p450 = scmp.lt.s32.totalorder %s17, 0
      %s451 = scalar_select %p450, %s17, 0
      %s452 = sadd.s32 %s451, %s449
      %s453 = smul.addr %s452, 4
      %s454 = scalar_lea.vmem %s1, %s453
      // Predicated region
      $region25: #{vit_forward_features.14} parent=23 // pred_check
        %p455 = pneg %p70
      $region26: #{vit_forward_features.14} parent=23 // pred_check_branch
        %457 = sbr.rel (%p455) target = $region28
      $region27: #{vit_forward_features.14} parent=23 // pred_region
        _
      $region28: #{vit_forward_features.14} parent=23 // pred_fallthru
        _
    $region24: #{vit_forward_features.14} parent=5 // pred_fallthru
      _
    %p458 = scmp.le.s32.totalorder 2, %s7
    // Predicated region
    $region29: #{vit_forward_features.14} parent=5 // pred_check
      %p459 = pneg %p458
    $region30: #{vit_forward_features.14} parent=5 // pred_check_branch
      %461 = sbr.rel (%p459) target = $region32
    $region31: #{vit_forward_features.14} parent=5 // pred_region
      %s462 = ssub.s32 %s7, 2
      // Predicated region
      $region33: #{vit_forward_features.14} parent=31 // pred_check
        %p463 = pneg %p76
      $region34: #{vit_forward_features.14} parent=31 // pred_check_branch
        %465 = sbr.rel (%p463) target = $region36
      $region35: #{vit_forward_features.14} parent=31 // pred_region
        %p466 = scmp.lt.s32.totalorder %s18, 1
        %s467 = scalar_select %p466, %s18, 1
        %p468 = scmp.lt.s32.totalorder %s19, 0
        %s469 = scalar_select %p468, %s19, 0
        %s470 = sadd.s32 %s469, %s467
        %s471 = smul.addr %s470, 4
        %s472 = scalar_lea.vmem %s1, %s471
      $region36: #{vit_forward_features.14} parent=31 // pred_fallthru
        _
    $region32: #{vit_forward_features.14} parent=5 // pred_fallthru
      _
  $region6: #{vit_forward_features.14} parent=0 // loop_footer
    %s11 = sadd.s32 1, %s7
  $region7: #{vit_forward_features.14} parent=0 // loop_footer_branch
    %6 = sbr.rel target = $region3
  $region8: #{vit_forward_features.14} parent=0 // loop_exit
    _

// kernel: vit_forward_features.15
$region0: #{vit_forward_features.15}
  #allocation0 [shape = 'u32[]', space=smem, size = 0x4, offset = 0x4, fixed_abs, tag = 'smem constant byte address 0x4 - core index']
  #allocation1 [shape = 'u32[72,128]{1,0:T(1,128)}', space=vmem, size = 0x9000, scoped, tag = 'internal scratch']
  #allocation2 [shape = 'f32[16,32]{1,0:T(8,128)}', space=vmem, size = 0x2000, scoped, tag = 'scratch operand']
  %s0 = inlined_call_operand.vmem [shape: bf16[16,32], index: 0, kind: input, shape index: {}]
  %s1 = inlined_call_operand.vmem [shape: bf16[32,32], index: 1, kind: input, shape index: {}]
  %s2 = inlined_call_operand.vmem [shape: f32[1,32], index: 2, kind: input, shape index: {}]
  %s3 = inlined_call_operand.vmem [shape: f32[16,32], index: 3, kind: input, shape index: {}, may-alias: {3,4}]
  %s4 = inlined_call_operand.vmem [shape: f32[16,32], index: 4, kind: output, shape index: {}, may-alias: {3,4}]
  %s5 = sld [smem:[#allocation0]]
  $region34: #{vit_forward_features.15} parent=0
    _
  %s7 = ssub.s32 1, %s5
  %s8 = scalar_select 0, %s7, %s5
  // Predicated region
  $region2: #{vit_forward_features.15} parent=0 // pred_check
    _
  $region3: #{vit_forward_features.15} parent=0 // pred_check_branch
    %10 = sbr.rel (0) target = $region5
  $region4: #{vit_forward_features.15} parent=0 // pred_region
    _
  $region5: #{vit_forward_features.15} parent=0 // pred_fallthru
    _
  // Predicated region
  $region6: #{vit_forward_features.15} parent=0 // pred_check
    _
  $region7: #{vit_forward_features.15} parent=0 // pred_check_branch
    %12 = sbr.rel (0) target = $region9
  $region8: #{vit_forward_features.15} parent=0 // pred_region
    _
  $region9: #{vit_forward_features.15} parent=0 // pred_fallthru
    _
  // Predicated region
  $region10: #{vit_forward_features.15} parent=0 // pred_check
    _
  $region11: #{vit_forward_features.15} parent=0 // pred_check_branch
    %14 = sbr.rel (0) target = $region13
  $region12: #{vit_forward_features.15} parent=0 // pred_region
    _
  $region13: #{vit_forward_features.15} parent=0 // pred_fallthru
    _
  // Predicated region
  $region14: #{vit_forward_features.15} parent=0 // pred_check
    _
  $region15: #{vit_forward_features.15} parent=0 // pred_check_branch
    %16 = sbr.rel (0) target = $region17
  $region16: #{vit_forward_features.15} parent=0 // pred_region
    _
  $region17: #{vit_forward_features.15} parent=0 // pred_fallthru
    _
  %p18 = scmp.eq.s32.totalorder 0, 0
  // Predicated region
  $region18: #{vit_forward_features.15} parent=0 // pred_check
    %p19 = pneg %p18
  $region19: #{vit_forward_features.15} parent=0 // pred_check_branch
    %21 = sbr.rel (%p19) target = $region21
  $region20: #{vit_forward_features.15} parent=0 // pred_region
    %vm22 = vcmask 261120
    %23 = vst.msk [vmem:[#allocation2] sm:$0xff] %vm22, 0.0
    %24 = vst.msk [vmem:[#allocation2 + $0x8] sm:$0xff] %vm22, 0.0
  $region21: #{vit_forward_features.15} parent=0 // pred_fallthru
    _
  %v25 = vld [vmem:[#allocation2] sm:$0xff]
  %v26 = vld [vmem:[#allocation2 + $0x8] sm:$0xff]
  %v27 = vld [vmem:[%s0] sm:$0xf]
  %v28 = vld [vmem:[%s0 + $0x4] sm:$0xf]
  %v29 = vld [vmem:[%s1] sm:$0xf]
  %v30 = vld [vmem:[%s1 + $0x4] sm:$0xf]
  %v31 = vld [vmem:[%s1 + $0x8] sm:$0xf]
  %v32 = vld [vmem:[%s1 + $0xc] sm:$0xf]
  %v35 = vunpack.c.l.b16 %v27
  %v36 = vunpack.c.l.b16 %v28
  %v37 = vpack.c.b16 %v36, %v35
  %v42 = vunpack.c.l.b16 %v29
  %v43 = vunpack.c.l.b16 %v30
  %v44 = vunpack.c.l.b16 %v31
  %v45 = vunpack.c.l.b16 %v32
  %v46 = vpack.c.b16 %v43, %v42
  %v47 = vpack.c.b16 %v45, %v44
  %vm50 = vcmask 261120
  %v52 = vsel %vm50, %v37, 0
  %54 = vmatpush.bf16.msra.mxu0 0
  %55 = vmatpush.bf16.msra.mxu0 0
  %56 = vmatpush.bf16.msra.mxu0 0
  %57 = vmatpush.bf16.msra.mxu0 0
  %58 = vmatpush.bf16.msra.mxu0 0
  %59 = vmatpush.bf16.msra.mxu0 0
  %60 = vmatpush.bf16.msra.mxu0 %v47
  %61 = vmatpush.bf16.msra.mxu0 %v46
  %62 = vmatmul.bf16.gmra.mxu0 %v52
  %v63 = vpop.f32.mrf.mxu0
  %v64 = vadd.f32 0.0, %v63
  %v65 = vpop.f32.mrf.mxu0
  %v66 = vadd.f32 0.0, %v65
  %67 = vdwg.mxu0
  %v68 = vadd.f32 %v25, %v64
  %v69 = vadd.f32 %v26, %v66
  %70 = vst.msk [vmem:[#allocation2] sm:$0xff] %vm50, %v68
  %71 = vst.msk [vmem:[#allocation2 + $0x8] sm:$0xff] %vm50, %v69
  // Predicated region
  $region22: #{vit_forward_features.15} parent=0 // pred_check
    %p72 = pneg %p18
  $region23: #{vit_forward_features.15} parent=0 // pred_check_branch
    %74 = sbr.rel (%p72) target = $region25
  $region24: #{vit_forward_features.15} parent=0 // pred_region
    %v75 = vld [vmem:[#allocation2] sm:$0xff]
    %v76 = vld [vmem:[#allocation2 + $0x8] sm:$0xff]
    %v77 = vld [vmem:[%s2] sm:$0x1]
    %v79 = vperm.slane %v77, 0
    %v81 = vadd.f32 %v75, %v79
    %v82 = vadd.f32 %v76, %v79
    %v83 = vld [vmem:[%s3] sm:$0xff]
    %v84 = vld [vmem:[%s3 + $0x8] sm:$0xff]
    %v85 = vadd.f32 %v81, %v83
    %v86 = vadd.f32 %v82, %v84
    %87 = vst.msk [vmem:[%s4] sm:$0xff] %vm50, %v85
    %88 = vst.msk [vmem:[%s4 + $0x8] sm:$0xff] %vm50, %v86
  $region25: #{vit_forward_features.15} parent=0 // pred_fallthru
    _
  // Predicated region
  $region26: #{vit_forward_features.15} parent=0 // pred_check
    _
  $region27: #{vit_forward_features.15} parent=0 // pred_check_branch
    %90 = sbr.rel (0) target = $region29
  $region28: #{vit_forward_features.15} parent=0 // pred_region
    _
  $region29: #{vit_forward_features.15} parent=0 // pred_fallthru
    _
  // Predicated region
  $region30: #{vit_forward_features.15} parent=0 // pred_check
    _
  $region31: #{vit_forward_features.15} parent=0 // pred_check_branch
    %92 = sbr.rel (0) target = $region33
  $region32: #{vit_forward_features.15} parent=0 // pred_region
    _
  $region33: #{vit_forward_features.15} parent=0 // pred_fallthru
    _

// kernel: vit_forward_features.17
$region0: #{vit_forward_features.17}
  #allocation0 [shape = 'u32[]', space=smem, size = 0x4, offset = 0x4, fixed_abs, tag = 'smem constant byte address 0x4 - core index']
  #allocation1 [shape = 'u32[72,128]{1,0:T(1,128)}', space=vmem, size = 0x9000, scoped, tag = 'internal scratch']
  #allocation2 [shape = 'f32[16,32]{1,0:T(8,128)}', space=vmem, size = 0x2000, scoped, tag = 'scratch operand']
  %s0 = inlined_call_operand.vmem [shape: bf16[16,128], index: 0, kind: input, shape index: {}]
  %s1 = inlined_call_operand.vmem [shape: bf16[128,32], index: 1, kind: input, shape index: {}]
  %s2 = inlined_call_operand.vmem [shape: f32[1,32], index: 2, kind: input, shape index: {}]
  %s3 = inlined_call_operand.vmem [shape: f32[16,32], index: 3, kind: input, shape index: {}, may-alias: {3,4}]
  %s4 = inlined_call_operand.vmem [shape: f32[16,32], index: 4, kind: output, shape index: {}, may-alias: {3,4}]
  %s5 = sld [smem:[#allocation0]]
  $region34: #{vit_forward_features.17} parent=0
    _
  %s7 = ssub.s32 1, %s5
  %s8 = scalar_select 0, %s7, %s5
  // Predicated region
  $region2: #{vit_forward_features.17} parent=0 // pred_check
    _
  $region3: #{vit_forward_features.17} parent=0 // pred_check_branch
    %10 = sbr.rel (0) target = $region5
  $region4: #{vit_forward_features.17} parent=0 // pred_region
    _
  $region5: #{vit_forward_features.17} parent=0 // pred_fallthru
    _
  // Predicated region
  $region6: #{vit_forward_features.17} parent=0 // pred_check
    _
  $region7: #{vit_forward_features.17} parent=0 // pred_check_branch
    %12 = sbr.rel (0) target = $region9
  $region8: #{vit_forward_features.17} parent=0 // pred_region
    _
  $region9: #{vit_forward_features.17} parent=0 // pred_fallthru
    _
  // Predicated region
  $region10: #{vit_forward_features.17} parent=0 // pred_check
    _
  $region11: #{vit_forward_features.17} parent=0 // pred_check_branch
    %14 = sbr.rel (0) target = $region13
  $region12: #{vit_forward_features.17} parent=0 // pred_region
    _
  $region13: #{vit_forward_features.17} parent=0 // pred_fallthru
    _
  // Predicated region
  $region14: #{vit_forward_features.17} parent=0 // pred_check
    _
  $region15: #{vit_forward_features.17} parent=0 // pred_check_branch
    %16 = sbr.rel (0) target = $region17
  $region16: #{vit_forward_features.17} parent=0 // pred_region
    _
  $region17: #{vit_forward_features.17} parent=0 // pred_fallthru
    _
  %p17 = scmp.eq.s32.totalorder 0, 0
  // Predicated region
  $region18: #{vit_forward_features.17} parent=0 // pred_check
    %p18 = pneg %p17
  $region19: #{vit_forward_features.17} parent=0 // pred_check_branch
    %20 = sbr.rel (%p18) target = $region21
  $region20: #{vit_forward_features.17} parent=0 // pred_region
    %vm21 = vcmask 261120
    %22 = vst.msk [vmem:[#allocation2] sm:$0xff] %vm21, 0.0
    %23 = vst.msk [vmem:[#allocation2 + $0x8] sm:$0xff] %vm21, 0.0
  $region21: #{vit_forward_features.17} parent=0 // pred_fallthru
    _
  %v24 = vld [vmem:[#allocation2] sm:$0xff]
  %v25 = vld [vmem:[#allocation2 + $0x8] sm:$0xff]
  %v26 = vld [vmem:[%s0] sm:$0xf]
  %v27 = vld [vmem:[%s0 + $0x4] sm:$0xf]
  %v28 = vld [vmem:[%s1] sm:$0xf]
  %v29 = vld [vmem:[%s1 + $0x4] sm:$0xf]
  %v30 = vld [vmem:[%s1 + $0x8] sm:$0xf]
  %v31 = vld [vmem:[%s1 + $0xc] sm:$0xf]
  %v32 = vld [vmem:[%s1 + $0x10] sm:$0xf]
  %v33 = vld [vmem:[%s1 + $0x14] sm:$0xf]
  %v34 = vld [vmem:[%s1 + $0x18] sm:$0xf]
  %v35 = vld [vmem:[%s1 + $0x1c] sm:$0xf]
  %v36 = vld [vmem:[%s1 + $0x20] sm:$0xf]
  %v37 = vld [vmem:[%s1 + $0x24] sm:$0xf]
  %v38 = vld [vmem:[%s1 + $0x28] sm:$0xf]
  %v39 = vld [vmem:[%s1 + $0x2c] sm:$0xf]
  %v40 = vld [vmem:[%s1 + $0x30] sm:$0xf]
  %v41 = vld [vmem:[%s1 + $0x34] sm:$0xf]
  %v42 = vld [vmem:[%s1 + $0x38] sm:$0xf]
  %v43 = vld [vmem:[%s1 + $0x3c] sm:$0xf]
  %v46 = vunpack.c.l.b16 %v26
  %v47 = vunpack.c.l.b16 %v27
  %v48 = vpack.c.b16 %v47, %v46
  %v66 = vunpack.c.l.b16 %v28
  %v67 = vunpack.c.l.b16 %v29
  %v68 = vunpack.c.l.b16 %v30
  %v69 = vunpack.c.l.b16 %v31
  %v70 = vunpack.c.l.b16 %v32
  %v71 = vunpack.c.l.b16 %v33
  %v72 = vunpack.c.l.b16 %v34
  %v73 = vunpack.c.l.b16 %v35
  %v74 = vunpack.c.l.b16 %v36
  %v75 = vunpack.c.l.b16 %v37
  %v76 = vunpack.c.l.b16 %v38
  %v77 = vunpack.c.l.b16 %v39
  %v78 = vunpack.c.l.b16 %v40
  %v79 = vunpack.c.l.b16 %v41
  %v80 = vunpack.c.l.b16 %v42
  %v81 = vunpack.c.l.b16 %v43
  %v82 = vpack.c.b16 %v67, %v66
  %v83 = vpack.c.b16 %v69, %v68
  %v84 = vpack.c.b16 %v71, %v70
  %v85 = vpack.c.b16 %v73, %v72
  %v86 = vpack.c.b16 %v75, %v74
  %v87 = vpack.c.b16 %v77, %v76
  %v88 = vpack.c.b16 %v79, %v78
  %v89 = vpack.c.b16 %v81, %v80
  %98 = vmatpush.bf16.msra.mxu0 %v89
  %99 = vmatpush.bf16.msra.mxu0 %v88
  %100 = vmatpush.bf16.msra.mxu0 %v87
  %101 = vmatpush.bf16.msra.mxu0 %v86
  %102 = vmatpush.bf16.msra.mxu0 %v85
  %103 = vmatpush.bf16.msra.mxu0 %v84
  %104 = vmatpush.bf16.msra.mxu0 %v83
  %105 = vmatpush.bf16.msra.mxu0 %v82
  %106 = vmatmul.bf16.gmra.mxu0 %v48
  %v107 = vpop.f32.mrf.mxu0
  %v108 = vadd.f32 0.0, %v107
  %v109 = vpop.f32.mrf.mxu0
  %v110 = vadd.f32 0.0, %v109
  %111 = vdwg.mxu0
  %v112 = vadd.f32 %v24, %v108
  %v113 = vadd.f32 %v25, %v110
  %vm114 = vcmask 261120
  %115 = vst.msk [vmem:[#allocation2] sm:$0xff] %vm114, %v112
  %116 = vst.msk [vmem:[#allocation2 + $0x8] sm:$0xff] %vm114, %v113
  // Predicated region
  $region22: #{vit_forward_features.17} parent=0 // pred_check
    %p117 = pneg %p17
  $region23: #{vit_forward_features.17} parent=0 // pred_check_branch
    %119 = sbr.rel (%p117) target = $region25
  $region24: #{vit_forward_features.17} parent=0 // pred_region
    %v120 = vld [vmem:[#allocation2] sm:$0xff]
    %v121 = vld [vmem:[#allocation2 + $0x8] sm:$0xff]
    %v122 = vld [vmem:[%s2] sm:$0x1]
    %v124 = vperm.slane %v122, 0
    %v126 = vadd.f32 %v120, %v124
    %v127 = vadd.f32 %v121, %v124
    %v128 = vld [vmem:[%s3] sm:$0xff]
    %v129 = vld [vmem:[%s3 + $0x8] sm:$0xff]
    %v130 = vadd.f32 %v126, %v128
    %v131 = vadd.f32 %v127, %v129
    %132 = vst.msk [vmem:[%s4] sm:$0xff] %vm114, %v130
    %133 = vst.msk [vmem:[%s4 + $0x8] sm:$0xff] %vm114, %v131
  $region25: #{vit_forward_features.17} parent=0 // pred_fallthru
    _
  // Predicated region
  $region26: #{vit_forward_features.17} parent=0 // pred_check
    _
  $region27: #{vit_forward_features.17} parent=0 // pred_check_branch
    %135 = sbr.rel (0) target = $region29
  $region28: #{vit_forward_features.17} parent=0 // pred_region
    _
  $region29: #{vit_forward_features.17} parent=0 // pred_fallthru
    _
  // Predicated region
  $region30: #{vit_forward_features.17} parent=0 // pred_check
    _
  $region31: #{vit_forward_features.17} parent=0 // pred_check_branch
    %137 = sbr.rel (0) target = $region33
  $region32: #{vit_forward_features.17} parent=0 // pred_region
    _
  $region33: #{vit_forward_features.17} parent=0 // pred_fallthru
    _

// kernel: vit_forward_features.23
$region0: #{vit_forward_features.23}
  #allocation0 [shape = 'u32[]', space=smem, size = 0x4, offset = 0x4, fixed_abs, tag = 'smem constant byte address 0x4 - core index']
  #allocation1 [shape = 'u32[72,128]{1,0:T(1,128)}', space=vmem, size = 0x9000, scoped, tag = 'internal scratch']
  #allocation2 [shape = 'bf16[2,32]{1,0:T(2,128)(2,1)}', space=vmem, size = 0x200, scoped, tag = 'scratch operand']
  %s0 = inlined_call_operand.vmem [shape: f32[2,32], index: 0, kind: input, shape index: {}]
  %s1 = inlined_call_operand.vmem [shape: f32[1,32], index: 1, kind: input, shape index: {}]
  %s2 = inlined_call_operand.vmem [shape: f32[1,32], index: 2, kind: input, shape index: {}]
  %s3 = inlined_call_operand.vmem [shape: bf16[32,32], index: 3, kind: input, shape index: {}]
  %s4 = inlined_call_operand.vmem [shape: f32[1,32], index: 4, kind: input, shape index: {}]
  %s5 = inlined_call_operand.hbm [shape: f32[2,32], index: 5, kind: output, shape index: {}]
  %s6 = sld [smem:[#allocation0]]
  $region34: #{vit_forward_features.23} parent=0
    _
  %s8 = ssub.s32 1, %s6
  %s9 = scalar_select 0, %s8, %s6
  $region1: #{vit_forward_features.23} parent=0
    #allocation3 [shape = 'u8[1024]{0}', space=vmem, size = 0x400, scoped, tag = 'output window, operand 0, single buffered']
    #allocation4 [shape = 's32[1]{0}', space=sflag, size = 0x4, scoped, tag = 'scoped memory for vit_forward_features.23']
    %10 = vsyncpa [#allocation4], 0
    // Predicated region
    $region2: #{vit_forward_features.23} parent=1 // pred_check
      _
    $region3: #{vit_forward_features.23} parent=1 // pred_check_branch
      %12 = sbr.rel (0) target = $region5
    $region4: #{vit_forward_features.23} parent=1 // pred_region
      _
    $region5: #{vit_forward_features.23} parent=1 // pred_fallthru
      _
    // Predicated region
    $region6: #{vit_forward_features.23} parent=1 // pred_check
      _
    $region7: #{vit_forward_features.23} parent=1 // pred_check_branch
      %14 = sbr.rel (0) target = $region9
    $region8: #{vit_forward_features.23} parent=1 // pred_region
      _
    $region9: #{vit_forward_features.23} parent=1 // pred_fallthru
      _
    // Predicated region
    $region10: #{vit_forward_features.23} parent=1 // pred_check
      _
    $region11: #{vit_forward_features.23} parent=1 // pred_check_branch
      %16 = sbr.rel (0) target = $region13
    $region12: #{vit_forward_features.23} parent=1 // pred_region
      _
    $region13: #{vit_forward_features.23} parent=1 // pred_fallthru
      _
    // Predicated region
    $region14: #{vit_forward_features.23} parent=1 // pred_check
      _
    $region15: #{vit_forward_features.23} parent=1 // pred_check_branch
      %18 = sbr.rel (0) target = $region17
    $region16: #{vit_forward_features.23} parent=1 // pred_region
      _
    $region17: #{vit_forward_features.23} parent=1 // pred_fallthru
      _
    // Predicated region
    $region18: #{vit_forward_features.23} parent=1 // pred_check
      _
    $region19: #{vit_forward_features.23} parent=1 // pred_check_branch
      %20 = sbr.rel (0) target = $region21
    $region20: #{vit_forward_features.23} parent=1 // pred_region
      _
    $region21: #{vit_forward_features.23} parent=1 // pred_fallthru
      _
    %p22 = scmp.eq.s32.totalorder 0, 0
    // Predicated region
    $region22: #{vit_forward_features.23} parent=1 // pred_check
      %p23 = pneg %p22
    $region23: #{vit_forward_features.23} parent=1 // pred_check_branch
      %25 = sbr.rel (%p23) target = $region25
    $region24: #{vit_forward_features.23} parent=1 // pred_region
      %v26 = vld [vmem:[%s0] sm:$0x3]
      %vm27 = vcmask 254976
      %v28 = vsel %vm27, %v26, 0.0
      %29 = vadd.xlane.f32.xlu0 %v28
      %v30 = vpop.xlane.xlu0 %29
      %v31 = vrcp.pop 32.0
      %v32 = vmul.f32 32.0, %v31
      %v33 = vsub.f32 1.0, %v32
      %v34 = vmul.f32 %v31, %v33
      %v35 = vadd.f32 %v31, %v34
      %vm36 = vweird.f32 %v31
      %v37 = vsel %vm36, %v31, %v35
      %v38 = vmul.f32 %v30, %v37
      %v39 = vsub.f32 %v26, %v38
      %v40 = vmul.f32 %v39, %v39
      %v41 = vsel %vm27, %v40, 0.0
      %42 = vadd.xlane.f32.xlu0 %v41
      %v43 = vpop.xlane.xlu0 %42
      %v44 = vmul.f32 %v43, %v37
      %v45 = vadd.f32 %v44, 1e-06
      %v46 = vrsqrt.pop %v45
      %v47 = vmul.f32 %v46, %v45
      %v48 = vmul.f32 %v47, %v46
      %v49 = vmul.f32 0.5, %v48
      %v50 = vsub.f32 1.5, %v49
      %v51 = vmul.f32 %v46, %v50
      %vm52 = vweird.f32 %v45
      %vm53 = vweird.f32 %v46
      %vm54 = vmor %vm52, %vm53
      %v55 = vsel %vm54, %v46, %v51
      %v56 = vmul.f32 %v39, %v55
      %v57 = vld [vmem:[%s1] sm:$0x1]
      %v59 = vperm.slane %v57, 0
      %v61 = vmul.f32 %v56, %v59
      %v62 = vld [vmem:[%s2] sm:$0x1]
      %v64 = vperm.slane %v62, 0
      %v66 = vadd.f32 %v61, %v64
      %v67 = vpack.c.bf16 %v66, %v66
      %vm68 = vcmask 253952
      %69 = vst.msk [vmem:[#allocation2] sm:$0x1] %vm68, %v67
    $region25: #{vit_forward_features.23} parent=1 // pred_fallthru
      _
    %v70 = vld [vmem:[#allocation2] sm:$0x1]
    %v71 = vld [vmem:[%s3] sm:$0xf]
    %v72 = vld [vmem:[%s3 + $0x4] sm:$0xf]
    %v73 = vld [vmem:[%s3 + $0x8] sm:$0xf]
    %v74 = vld [vmem:[%s3 + $0xc] sm:$0xf]
    %v75 = vld [vmem:[%s4] sm:$0x1]
    %v77 = vperm.slane %v75, 0
    %v83 = vunpack.c.l.b16 %v71
    %v84 = vunpack.c.l.b16 %v72
    %v85 = vunpack.c.l.b16 %v73
    %v86 = vunpack.c.l.b16 %v74
    %v87 = vpack.c.b16 %v84, %v83
    %v88 = vpack.c.b16 %v86, %v85
    %vm91 = vcmask 261120
    %v93 = vsel %vm91, %v70, 0
    %95 = vmatpush.bf16.msra.mxu0 0
    %96 = vmatpush.bf16.msra.mxu0 0
    %97 = vmatpush.bf16.msra.mxu0 0
    %98 = vmatpush.bf16.msra.mxu0 0
    %99 = vmatpush.bf16.msra.mxu0 0
    %100 = vmatpush.bf16.msra.mxu0 0
    %101 = vmatpush.bf16.msra.mxu0 %v88
    %102 = vmatpush.bf16.msra.mxu0 %v87
    %103 = vmatmul.bf16.gmra.mxu0 %v93
    %v104 = vpop.f32.mrf.mxu0
    %v105 = vadd.f32 %v77, %v104
    %v106 = vpop.f32.mrf.mxu0
    %107 = vdwg.mxu0
    %v108 = vtanh.pop %v105
    %vm109 = vcmask 254976
    %110 = vst.msk [vmem:[#allocation3] sm:$0x3] %vm109, %v108
    // Predicated region
    $region26: #{vit_forward_features.23} parent=1 // pred_check
      _
    $region27: #{vit_forward_features.23} parent=1 // pred_check_branch
      %112 = sbr.rel (0) target = $region29
    $region28: #{vit_forward_features.23} parent=1 // pred_region
      %114 = vsyncadd [#allocation4], 0
      %s116 = sshll.u32 [#allocation3], 4
      %s117 = int_to_ptr.vmem [resolvable:$true] %s116
      %s118 = sshll.u32 %s5, 4
      %s119 = int_to_ptr.hbm [resolvable:$true] %s118
      %121 = dma.vmem_to_hbm [thread:$0]  %s117, 32, %s119, [#allocation4]
    $region29: #{vit_forward_features.23} parent=1 // pred_fallthru
      _
    // Predicated region
    $region30: #{vit_forward_features.23} parent=1 // pred_check
      _
    $region31: #{vit_forward_features.23} parent=1 // pred_check_branch
      %123 = sbr.rel (0) target = $region33
    $region32: #{vit_forward_features.23} parent=1 // pred_region
      %125 = dma.done [#allocation4], 32
    $region33: #{vit_forward_features.23} parent=1 // pred_fallthru
      _
    %126 = vsyncpa [#allocation4], 1

// kernel: vit_forward_features.16
$region0: #{vit_forward_features.16}
  #allocation0 [shape = 'u32[]', space=smem, size = 0x4, offset = 0x4, fixed_abs, tag = 'smem constant byte address 0x4 - core index']
  #allocation1 [shape = 'u32[72,128]{1,0:T(1,128)}', space=vmem, size = 0x9000, scoped, tag = 'internal scratch']
  #allocation2 [shape = 'bf16[16,32]{1,0:T(8,128)(2,1)}', space=vmem, size = 0x1000, scoped, tag = 'scratch operand']
  %s0 = inlined_call_operand.vmem [shape: f32[16,32], index: 0, kind: input, shape index: {}]
  %s1 = inlined_call_operand.vmem [shape: f32[1,32], index: 1, kind: input, shape index: {}]
  %s2 = inlined_call_operand.vmem [shape: f32[1,32], index: 2, kind: input, shape index: {}]
  %s3 = inlined_call_operand.vmem [shape: bf16[32,128], index: 3, kind: input, shape index: {}]
  %s4 = inlined_call_operand.vmem [shape: f32[1,128], index: 4, kind: input, shape index: {}]
  %s5 = inlined_call_operand.vmem [shape: bf16[16,128], index: 5, kind: output, shape index: {}]
  %s6 = sld [smem:[#allocation0]]
  $region34: #{vit_forward_features.16} parent=0
    _
  %s8 = ssub.s32 1, %s6
  %s9 = scalar_select 0, %s8, %s6
  // Predicated region
  $region2: #{vit_forward_features.16} parent=0 // pred_check
    _
  $region3: #{vit_forward_features.16} parent=0 // pred_check_branch
    %11 = sbr.rel (0) target = $region5
  $region4: #{vit_forward_features.16} parent=0 // pred_region
    _
  $region5: #{vit_forward_features.16} parent=0 // pred_fallthru
    _
  // Predicated region
  $region6: #{vit_forward_features.16} parent=0 // pred_check
    _
  $region7: #{vit_forward_features.16} parent=0 // pred_check_branch
    %13 = sbr.rel (0) target = $region9
  $region8: #{vit_forward_features.16} parent=0 // pred_region
    _
  $region9: #{vit_forward_features.16} parent=0 // pred_fallthru
    _
  // Predicated region
  $region10: #{vit_forward_features.16} parent=0 // pred_check
    _
  $region11: #{vit_forward_features.16} parent=0 // pred_check_branch
    %15 = sbr.rel (0) target = $region13
  $region12: #{vit_forward_features.16} parent=0 // pred_region
    _
  $region13: #{vit_forward_features.16} parent=0 // pred_fallthru
    _
  // Predicated region
  $region14: #{vit_forward_features.16} parent=0 // pred_check
    _
  $region15: #{vit_forward_features.16} parent=0 // pred_check_branch
    %17 = sbr.rel (0) target = $region17
  $region16: #{vit_forward_features.16} parent=0 // pred_region
    _
  $region17: #{vit_forward_features.16} parent=0 // pred_fallthru
    _
  // Predicated region
  $region18: #{vit_forward_features.16} parent=0 // pred_check
    _
  $region19: #{vit_forward_features.16} parent=0 // pred_check_branch
    %19 = sbr.rel (0) target = $region21
  $region20: #{vit_forward_features.16} parent=0 // pred_region
    _
  $region21: #{vit_forward_features.16} parent=0 // pred_fallthru
    _
  %p21 = scmp.eq.s32.totalorder 0, 0
  // Predicated region
  $region22: #{vit_forward_features.16} parent=0 // pred_check
    %p22 = pneg %p21
  $region23: #{vit_forward_features.16} parent=0 // pred_check_branch
    %24 = sbr.rel (%p22) target = $region25
  $region24: #{vit_forward_features.16} parent=0 // pred_region
    %v25 = vld [vmem:[%s0] sm:$0xff]
    %v26 = vld [vmem:[%s0 + $0x8] sm:$0xff]
    %vm27 = vcmask 261120
    %v28 = vsel %vm27, %v25, 0.0
    %29 = vadd.xlane.f32.xlu0 %v28
    %v30 = vpop.xlane.xlu0 %29
    %v31 = vsel %vm27, %v26, 0.0
    %32 = vadd.xlane.f32.xlu0 %v31
    %v33 = vpop.xlane.xlu0 %32
    %v34 = vrcp.pop 32.0
    %v35 = vmul.f32 32.0, %v34
    %v36 = vsub.f32 1.0, %v35
    %v37 = vmul.f32 %v34, %v36
    %v38 = vadd.f32 %v34, %v37
    %vm39 = vweird.f32 %v34
    %v40 = vsel %vm39, %v34, %v38
    %v41 = vmul.f32 %v30, %v40
    %v42 = vmul.f32 %v33, %v40
    %v43 = vsub.f32 %v25, %v41
    %v44 = vsub.f32 %v26, %v42
    %v45 = vmul.f32 %v43, %v43
    %v46 = vmul.f32 %v44, %v44
    %v47 = vsel %vm27, %v45, 0.0
    %48 = vadd.xlane.f32.xlu0 %v47
    %v49 = vpop.xlane.xlu0 %48
    %v50 = vsel %vm27, %v46, 0.0
    %51 = vadd.xlane.f32.xlu0 %v50
    %v52 = vpop.xlane.xlu0 %51
    %v53 = vmul.f32 %v49, %v40
    %v54 = vmul.f32 %v52, %v40
    %v55 = vadd.f32 %v53, 1e-06
    %v56 = vadd.f32 %v54, 1e-06
    %v57 = vrsqrt.pop %v55
    %v58 = vmul.f32 %v57, %v55
    %v59 = vmul.f32 %v58, %v57
    %v60 = vmul.f32 0.5, %v59
    %v61 = vsub.f32 1.5, %v60
    %v62 = vmul.f32 %v57, %v61
    %vm63 = vweird.f32 %v55
    %vm64 = vweird.f32 %v57
    %vm65 = vmor %vm63, %vm64
    %v66 = vsel %vm65, %v57, %v62
    %v67 = vrsqrt.pop %v56
    %v68 = vmul.f32 %v67, %v56
    %v69 = vmul.f32 %v68, %v67
    %v70 = vmul.f32 0.5, %v69
    %v71 = vsub.f32 1.5, %v70
    %v72 = vmul.f32 %v67, %v71
    %vm73 = vweird.f32 %v56
    %vm74 = vweird.f32 %v67
    %vm75 = vmor %vm73, %vm74
    %v76 = vsel %vm75, %v67, %v72
    %v77 = vmul.f32 %v43, %v66
    %v78 = vmul.f32 %v44, %v76
    %v79 = vld [vmem:[%s1] sm:$0x1]
    %v81 = vperm.slane %v79, 0
    %v83 = vmul.f32 %v77, %v81
    %v84 = vmul.f32 %v78, %v81
    %v85 = vld [vmem:[%s2] sm:$0x1]
    %v87 = vperm.slane %v85, 0
    %v89 = vadd.f32 %v83, %v87
    %v90 = vadd.f32 %v84, %v87
    %v91 = vpack.c.bf16 %v89, %v89
    %v92 = vpack.c.bf16 %v90, %v90
    %vm93 = vcmask 257024
    %94 = vst.msk [vmem:[#allocation2] sm:$0xf] %vm93, %v91
    %95 = vst.msk [vmem:[#allocation2 + $0x4] sm:$0xf] %vm93, %v92
  $region25: #{vit_forward_features.16} parent=0 // pred_fallthru
    _
  %v96 = vld [vmem:[#allocation2] sm:$0xf]
  %v97 = vld [vmem:[#allocation2 + $0x4] sm:$0xf]
  %v98 = vld [vmem:[%s3] sm:$0xf]
  %v99 = vld [vmem:[%s3 + $0x4] sm:$0xf]
  %v100 = vld [vmem:[%s3 + $0x8] sm:$0xf]
  %v101 = vld [vmem:[%s3 + $0xc] sm:$0xf]
  %v102 = vld [vmem:[%s4] sm:$0x1]
  %v104 = vperm.slane %v102, 0
  %v108 = vunpack.c.l.b16 %v96
  %v109 = vunpack.c.l.b16 %v97
  %v110 = vpack.c.b16 %v109, %v108
  %v115 = vunpack.c.l.b16 %v98
  %v116 = vunpack.c.l.b16 %v99
  %v117 = vunpack.c.l.b16 %v100
  %v118 = vunpack.c.l.b16 %v101
  %v119 = vpack.c.b16 %v116, %v115
  %v120 = vpack.c.b16 %v118, %v117
  %vm123 = vcmask 261120
  %v125 = vsel %vm123, %v110, 0
  %127 = vmatpush.bf16.msra.mxu0 0
  %128 = vmatpush.bf16.msra.mxu0 0
  %129 = vmatpush.bf16.msra.mxu0 0
  %130 = vmatpush.bf16.msra.mxu0 0
  %131 = vmatpush.bf16.msra.mxu0 0
  %132 = vmatpush.bf16.msra.mxu0 0
  %133 = vmatpush.bf16.msra.mxu0 %v120
  %134 = vmatpush.bf16.msra.mxu0 %v119
  %135 = vmatmul.bf16.gmra.mxu0 %v125
  %v136 = vpop.f32.mrf.mxu0
  %v137 = vadd.f32 %v104, %v136
  %v138 = vpop.f32.mrf.mxu0
  %v139 = vadd.f32 %v104, %v138
  %140 = vdwg.mxu0
  %v141 = vmul.f32 %v137, %v137
  %v142 = vmul.f32 %v139, %v139
  %v143 = vmul.f32 %v137, %v141
  %v144 = vmul.f32 %v139, %v142
  %v145 = vmul.f32 %v143, 0.044715
  %v146 = vmul.f32 %v144, 0.044715
  %v147 = vadd.f32 %v137, %v145
  %v148 = vadd.f32 %v139, %v146
  %v149 = vmul.f32 %v147, 0.7978846
  %v150 = vmul.f32 %v148, 0.7978846
  %v151 = vtanh.pop %v149
  %v152 = vtanh.pop %v150
  %v153 = vadd.f32 %v151, 1.0
  %v154 = vadd.f32 %v152, 1.0
  %v155 = vmul.f32 %v153, 0.5
  %v156 = vmul.f32 %v154, 0.5
  %v157 = vmul.f32 %v137, %v155
  %v158 = vmul.f32 %v139, %v156
  %v159 = vpack.c.bf16 %v157, %v157
  %v160 = vpack.c.bf16 %v158, %v158
  %161 = vst [vmem:[%s5] sm:$0xf] %v159
  %162 = vst [vmem:[%s5 + $0x4] sm:$0xf] %v160
  // Predicated region
  $region26: #{vit_forward_features.16} parent=0 // pred_check
    _
  $region27: #{vit_forward_features.16} parent=0 // pred_check_branch
    %164 = sbr.rel (0) target = $region29
  $region28: #{vit_forward_features.16} parent=0 // pred_region
    _
  $region29: #{vit_forward_features.16} parent=0 // pred_fallthru
    _
  // Predicated region
  $region30: #{vit_forward_features.16} parent=0 // pred_check
    _
  $region31: #{vit_forward_features.16} parent=0 // pred_check_branch
    %166 = sbr.rel (0) target = $region33
  $region32: #{vit_forward_features.16} parent=0 // pred_region
    _
  $region33: #{vit_forward_features.16} parent=0 // pred_fallthru
    _

</llo_original>
